<compile_context>
chip_gen: v5e
topology: v5e:2x2
jax: 0.10.0
libtpu: 0.0.40
codegen_flags: <defaults>
</compile_context>

<pallas_src>
import functools
import math

import jax
import jax.numpy as jnp
from jax.experimental import pallas as pl
from jax.experimental.pallas import tpu as pltpu


# ----------------------------------------------------------------------------
# Fused forward kernel.  One grid step handles BT batch slices.
# Refs: x (BT,n,dim), w_in (dim, 2*h*dqk + h*dv), w_out (h, dv, dim),
#       b_out (1, dim)  ->  o (BT,n,dim) [, p (h, BT, n, n)]
# ----------------------------------------------------------------------------
def _fused_forward_kernel(x_ref, w_in_ref, w_out_ref, b_out_ref, o_ref, *rest,
                          heads, qk_dim, v_dim, scale, write_probs):
    p_ref = rest[0] if write_probs else None
    BT, n, dim = x_ref.shape
    h, dqk, dv = heads, qk_dim, v_dim
    in_dtype = x_ref.dtype

    # --- fused Q|K|V projection: ONE wide GEMM, f32 MXU accumulation --------
    x2 = x_ref[...].reshape(BT * n, dim)
    proj = jnp.dot(x2, w_in_ref[...],
                   preferred_element_type=jnp.float32)        # (BT*n, 2*h*dqk+h*dv)

    # --- head-major stack (lane slices + one major-axis concat; avoids a
    #     mixed sublane/major transpose) so every matmul below is a single
    #     batched MXU einsum over the merged (h*BT) axis ----------------------
    def stack_heads(base, d):
        parts = [proj[:, base + i * d: base + (i + 1) * d].reshape(1, BT, n, d)
                 for i in range(h)]
        return jnp.concatenate(parts, axis=0).reshape(h * BT, n, d)

    q = stack_heads(0, dqk) * scale          # scale folded into q (n*dqk muls)
    k = stack_heads(h * dqk, dqk)
    v = stack_heads(2 * h * dqk, dv)

    # --- scaled-dot-product softmax attention, all heads batched ------------
    s = jnp.einsum("bqd,bkd->bqk", q, k,
                   preferred_element_type=jnp.float32)        # (h*BT, n, n)
    m = jnp.max(s, axis=-1, keepdims=True)
    e = jnp.exp(s - m)
    # exact reciprocal: returned probabilities sum to 1 to f32 accuracy.
    p = e * (1.0 / jnp.sum(e, axis=-1, keepdims=True))

    if write_probs:
        # ONE full-block store per grid step (no per-head strided sub-stores).
        p_ref[...] = p.reshape(h, BT, n, n).astype(p_ref.dtype)

    o = jnp.einsum("bqk,bkd->bqd",
                   p.astype(in_dtype), v.astype(in_dtype),
                   preferred_element_type=jnp.float32)        # (h*BT, n, dv)

    # --- output projection: head-batched GEMM + reduction over heads,
    #     bias added once (== concat(head_outputs) @ W_out + b) --------------
    o3 = o.reshape(h, BT * n, dv).astype(in_dtype)
    out_h = jnp.einsum("hmd,hde->hme", o3, w_out_ref[...],
                       preferred_element_type=jnp.float32)    # (h, BT*n, dim)
    out = jnp.sum(out_h, axis=0) + b_out_ref[...].astype(jnp.float32)
    o_ref[...] = out.reshape(BT, n, dim).astype(o_ref.dtype)


# ----------------------------------------------------------------------------
# Generation-aware tiling heuristics
# ----------------------------------------------------------------------------
def _vmem_budget_and_cap():
    """Per-step working-set budget and physical VMEM capacity."""
    cap = 64 << 20                      # conservative default (v7x per-core)
    try:
        cap = int(pltpu.get_tpu_info().vmem_capacity_bytes)
    except Exception:
        pass
    # Large-VMEM parts (v5e/v6e: 128 MiB) -> up to 48 MiB working set;
    # small parts (v7x: 64 MiB) -> ~55% of capacity, never near the limit.
    return min(48 << 20, int(cap * 0.55)), cap


def _mxu_m_floor():
    """Minimum M (= BT*n) to feed the MXU: 128 on v5e, 256 on v6e/v7x."""
    try:
        kind = jax.devices()[0].device_kind.lower()
        if "v5 lite" in kind or "v5e" in kind or "v5lite" in kind:
            return 128
    except Exception:
        pass
    return 256


def _choose_batch_block(B, n, per_slice_bytes, weight_bytes, budget_bytes, mxu_m):
    """Pick the batch block BT: fits budget, feeds the MXU (BT*n >= mxu_m),
    prefers >=2 (and even) grid steps, then the largest block."""
    floor_bt = max(1, -(-mxu_m // n))                 # ceil(mxu_m / n)
    cands = sorted({d for d in range(1, B + 1) if B % d == 0}
                   | {min(floor_bt, B)})              # may require padding B
    fitting = [d for d in cands
               if weight_bytes + d * per_slice_bytes <= budget_bytes]
    if not fitting:
        return 1

    def score(d):
        steps = -(-B // d)
        return (d * n >= mxu_m,     # MXU M-floor
                steps >= 2,         # pipelining / second core has work
                steps % 2 == 0,     # even split across v7x TensorCores
                d)                  # then biggest block
    return max(fitting, key=score)


# ----------------------------------------------------------------------------
# Module wrapper
# ----------------------------------------------------------------------------
def init_params(key, dim, qk_dim, v_dim, heads):
    """Deterministic PyTorch-style (Kaiming-uniform) Linear init.
    Weights stored pre-transposed as (in_features, out_features)."""
    inner_qk = qk_dim * heads
    inner_v = v_dim * heads
    k_qk, k_v, k_ow, k_ob = jax.random.split(key, 4)

    def uni(k, shape, fan_in):
        bound = 1.0 / math.sqrt(fan_in)
        return jax.random.uniform(k, shape, jnp.float32, -bound, bound)

    return {
        "w_qk": uni(k_qk, (dim, 2 * inner_qk), dim),
        "w_v": uni(k_v, (dim, inner_v), dim),
        "w_out": uni(k_ow, (inner_v, dim), inner_v),
        "b_out": uni(k_ob, (dim,), inner_v),
    }


def base_attention_forward(x, params, *, heads, qk_dim, v_dim, return_info=True):
    l = x.ndim
    if l == 3:
        x = x[None]
    b1, b2, n, dim = x.shape
    h, dqk, dv = heads, qk_dim, v_dim
    B = b1 * b2
    xb = x.reshape(B, n, dim)

    C = 2 * h * dqk + h * dv
    itemsize = x.dtype.itemsize
    w_itemsize = params["w_qk"].dtype.itemsize

    # Per-batch-slice working set: f32 temps + double-buffered I/O blocks.
    temps = 4 * (2 * n * C + 3 * h * n * n + h * n * dv + h * n * dim + 2 * n * dim)
    io = 2 * itemsize * (2 * n * dim) + (2 * 4 * h * n * n if return_info else 0)
    per_slice = temps + io
    # Weights counted double-buffered (worst case if Buffered(1) falls back).
    weight_bytes = 2 * w_itemsize * (dim * C + h * dv * dim + dim)

    budget, vmem_cap = _vmem_budget_and_cap()
    BT = _choose_batch_block(B, n, per_slice, weight_bytes, budget, _mxu_m_floor())
    steps = -(-B // BT)
    B_pad = steps * BT
    if B_pad != B:                                   # pad batch to a full grid
        xb = jnp.pad(xb, ((0, B_pad - B), (0, 0), (0, 0)))

    est = weight_bytes + BT * per_slice
    vmem_limit = int(min(int(vmem_cap * 0.9),
                         max(2 * est + (4 << 20), 32 << 20)))

    scale = 1.0 / math.sqrt(dqk)
    kernel = functools.partial(_fused_forward_kernel, heads=h, qk_dim=dqk,
                               v_dim=dv, scale=scale, write_probs=return_info)

    # Weight prep (outside the kernel): fused q|k|v projection weight,
    # head-major output-projection weight, 2-D bias.
    w_in = jnp.concatenate([params["w_qk"], params["w_v"]], axis=1)   # (dim, C)
    w_out3 = params["w_out"].reshape(h, dv, dim)
    b_out2 = params["b_out"].reshape(1, dim)

    out_sds = jax.ShapeDtypeStruct((B_pad, n, dim), x.dtype)
    p_sds = jax.ShapeDtypeStruct((h, B_pad, n, n), jnp.float32)

    def run(single_buffer_weights):
        wkw = ({"pipeline_mode": pl.Buffered(1)} if single_buffer_weights else {})
        in_specs = [
            pl.BlockSpec((BT, n, dim), lambda i: (i, 0, 0)),
            pl.BlockSpec((dim, C), lambda i: (0, 0), **wkw),            # resident
            pl.BlockSpec((h, dv, dim), lambda i: (0, 0, 0), **wkw),     # resident
            pl.BlockSpec((1, dim), lambda i: (0, 0), **wkw),            # resident
        ]
        o_spec = pl.BlockSpec((BT, n, dim), lambda i: (i, 0, 0))
        if return_info:
            out_shape = (out_sds, p_sds)
            out_specs = (o_spec,
                         pl.BlockSpec((h, BT, n, n), lambda i: (0, i, 0, 0)))
        else:
            out_shape = out_sds
            out_specs = o_spec
        return pl.pallas_call(
            kernel,
            out_shape=out_shape,
            grid=(steps,),
            in_specs=in_specs,
            out_specs=out_specs,
            compiler_params=pltpu.CompilerParams(
                dimension_semantics=("parallel",),
                vmem_limit_bytes=vmem_limit),
        )(xb, w_in, w_out3, b_out2)

    try:
        res = run(True)        # weights resident with a single VMEM buffer
    except Exception:
        res = run(False)       # safe fallback: default double-buffered weights

    if return_info:
        out_raw, p_raw = res
    else:
        out_raw, p_raw = res, None

    out = out_raw[:B].reshape(b1, b2, n, dim)
    if l == 3:
        out = out[0]

    info = None
    if return_info:
        info = jnp.transpose(p_raw[:, :B], (1, 0, 2, 3)).reshape(b1, b2, h, n, n)
    return out, info


# ----------------------------------------------------------------------------
if __name__ == "__main__":
    dim, qk_dim, v_dim, heads = 32, 8, 8, 4
    b1, b2, n = 2, 2, 8

    key = jax.random.PRNGKey(0)
    k_x, k_p = jax.random.split(key)
    x = jax.random.normal(k_x, (b1, b2, n, dim), dtype=jnp.float32)
    params = init_params(k_p, dim, qk_dim, v_dim, heads)

    out, info = base_attention_forward(
        x, params, heads=heads, qk_dim=qk_dim, v_dim=v_dim)
    jax.block_until_ready(out)
    jax.block_until_ready(info)

    assert out.shape == (b1, b2, n, dim), out.shape
    assert info.shape == (b1, b2, heads, n, n), info.shape

    # exact softmax -> rows sum to 1 to f32 accuracy
    row_sums = jnp.sum(info, axis=-1)
    assert bool(jnp.all(jnp.abs(row_sums - 1.0) < 1e-3))

    # pure-JAX reference check
    def reference(xr, pr):
        qk = xr @ pr["w_qk"]
        q, k = jnp.split(qk, 2, axis=-1)
        v = xr @ pr["w_v"]

        def split_heads(t, d):
            return t.reshape(b1, b2, n, heads, d).transpose(0, 1, 3, 2, 4)

        qh, kh, vh = split_heads(q, qk_dim), split_heads(k, qk_dim), split_heads(v, v_dim)
        s = jnp.einsum("...qd,...kd->...qk", qh, kh) / math.sqrt(qk_dim)
        p = jax.nn.softmax(s, axis=-1)
        o = jnp.einsum("...qk,...kd->...qd", p, vh)
        o = o.transpose(0, 1, 3, 2, 4).reshape(b1, b2, n, heads * v_dim)
        return o @ pr["w_out"] + pr["b_out"], p

    ref_out, ref_p = reference(x, params)
    assert bool(jnp.allclose(out, ref_out, atol=1e-2, rtol=1e-2))
    assert bool(jnp.allclose(info, ref_p, atol=1e-2, rtol=1e-2))

    # info-less fast path (skips the O(n^2) probability writeback)
    out_fast, info_fast = base_attention_forward(
        x, params, heads=heads, qk_dim=qk_dim, v_dim=v_dim, return_info=False)
    jax.block_until_ready(out_fast)
    assert info_fast is None
    assert bool(jnp.allclose(out_fast, out, atol=1e-4, rtol=1e-4))

    print("KERNEL_OK")
</pallas_src>

<mosaic_0001>
module attributes {stable_mosaic.version = 11 : i64} {
  func.func @_fused_forward_kernel(%arg0: i32, %arg1: memref<2x8x32xf32, #tpu.memory_space<vmem>>, %arg2: memref<32x96xf32, #tpu.memory_space<vmem>>, %arg3: memref<4x8x32xf32, #tpu.memory_space<vmem>>, %arg4: memref<1x32xf32, #tpu.memory_space<vmem>>, %arg5: memref<2x8x32xf32, #tpu.memory_space<vmem>>, %arg6: memref<4x2x8x8xf32, #tpu.memory_space<vmem>>) attributes {dimension_semantics = [#tpu.dimension_semantics<parallel>], iteration_bounds = array<i64: 2>, scalar_prefetch = 0 : i64, scratch_operands = 0 : i64, tpu.core_type = #tpu.core_type<tc>, window_params = [{transform_indices = @transform_0, window_bounds = array<i64: 2, 8, 32>}, {pipeline_mode = #tpu.pipeline_mode<synchronous>, transform_indices = @transform_1, window_bounds = array<i64: 32, 96>}, {pipeline_mode = #tpu.pipeline_mode<synchronous>, transform_indices = @transform_2, window_bounds = array<i64: 4, 8, 32>}, {pipeline_mode = #tpu.pipeline_mode<synchronous>, transform_indices = @transform_3, window_bounds = array<i64: 1, 32>}, {transform_indices = @transform_4, window_bounds = array<i64: 2, 8, 32>}, {transform_indices = @transform_5, window_bounds = array<i64: 4, 2, 8, 8>}]} {
    %c0 = arith.constant 0 : index
    %c0_0 = arith.constant 0 : index
    %c0_1 = arith.constant 0 : index
    %0 = vector.load %arg1[%c0, %c0_0, %c0_1] : memref<2x8x32xf32, #tpu.memory_space<vmem>>, vector<2x8x32xf32>
    %1 = vector.shape_cast %0 : vector<2x8x32xf32> to vector<16x32xf32>
    %c0_2 = arith.constant 0 : index
    %c0_3 = arith.constant 0 : index
    %2 = vector.load %arg2[%c0_2, %c0_3] : memref<32x96xf32, #tpu.memory_space<vmem>>, vector<32x96xf32>
    %cst = arith.constant dense<0.000000e+00> : vector<16x96xf32>
    %3 = tpu.matmul %1, %2, %cst {dimension_numbers = #tpu.dot_dimension_numbers<[1], [0], [0], [1], [0, 0, 1, 1], [], []>} : vector<16x32xf32>, vector<32x96xf32>, vector<16x96xf32> -> vector<16x96xf32>
    %4 = vector.extract_strided_slice %3 {offsets = [0, 0], sizes = [16, 8], strides = [1, 1]} : vector<16x96xf32> to vector<16x8xf32>
    %5 = vector.shape_cast %4 : vector<16x8xf32> to vector<1x2x8x8xf32>
    %6 = vector.extract_strided_slice %3 {offsets = [0, 8], sizes = [16, 8], strides = [1, 1]} : vector<16x96xf32> to vector<16x8xf32>
    %7 = vector.shape_cast %6 : vector<16x8xf32> to vector<1x2x8x8xf32>
    %8 = vector.extract_strided_slice %3 {offsets = [0, 16], sizes = [16, 8], strides = [1, 1]} : vector<16x96xf32> to vector<16x8xf32>
    %9 = vector.shape_cast %8 : vector<16x8xf32> to vector<1x2x8x8xf32>
    %10 = vector.extract_strided_slice %3 {offsets = [0, 24], sizes = [16, 8], strides = [1, 1]} : vector<16x96xf32> to vector<16x8xf32>
    %11 = vector.shape_cast %10 : vector<16x8xf32> to vector<1x2x8x8xf32>
    %12 = tpu.concatenate %5, %7, %9, %11 in 0 : vector<1x2x8x8xf32>, vector<1x2x8x8xf32>, vector<1x2x8x8xf32>, vector<1x2x8x8xf32> -> vector<4x2x8x8xf32>
    %13 = vector.shape_cast %12 : vector<4x2x8x8xf32> to vector<8x8x8xf32>
    %cst_4 = arith.constant 0.353553385 : f32
    %14 = vector.broadcast %cst_4 : f32 to vector<8x8x8xf32>
    %15 = arith.mulf %13, %14 : vector<8x8x8xf32>
    %16 = vector.extract_strided_slice %3 {offsets = [0, 32], sizes = [16, 8], strides = [1, 1]} : vector<16x96xf32> to vector<16x8xf32>
    %17 = vector.shape_cast %16 : vector<16x8xf32> to vector<1x2x8x8xf32>
    %18 = vector.extract_strided_slice %3 {offsets = [0, 40], sizes = [16, 8], strides = [1, 1]} : vector<16x96xf32> to vector<16x8xf32>
    %19 = vector.shape_cast %18 : vector<16x8xf32> to vector<1x2x8x8xf32>
    %20 = vector.extract_strided_slice %3 {offsets = [0, 48], sizes = [16, 8], strides = [1, 1]} : vector<16x96xf32> to vector<16x8xf32>
    %21 = vector.shape_cast %20 : vector<16x8xf32> to vector<1x2x8x8xf32>
    %22 = vector.extract_strided_slice %3 {offsets = [0, 56], sizes = [16, 8], strides = [1, 1]} : vector<16x96xf32> to vector<16x8xf32>
    %23 = vector.shape_cast %22 : vector<16x8xf32> to vector<1x2x8x8xf32>
    %24 = tpu.concatenate %17, %19, %21, %23 in 0 : vector<1x2x8x8xf32>, vector<1x2x8x8xf32>, vector<1x2x8x8xf32>, vector<1x2x8x8xf32> -> vector<4x2x8x8xf32>
    %25 = vector.shape_cast %24 : vector<4x2x8x8xf32> to vector<8x8x8xf32>
    %26 = vector.extract_strided_slice %3 {offsets = [0, 64], sizes = [16, 8], strides = [1, 1]} : vector<16x96xf32> to vector<16x8xf32>
    %27 = vector.shape_cast %26 : vector<16x8xf32> to vector<1x2x8x8xf32>
    %28 = vector.extract_strided_slice %3 {offsets = [0, 72], sizes = [16, 8], strides = [1, 1]} : vector<16x96xf32> to vector<16x8xf32>
    %29 = vector.shape_cast %28 : vector<16x8xf32> to vector<1x2x8x8xf32>
    %30 = vector.extract_strided_slice %3 {offsets = [0, 80], sizes = [16, 8], strides = [1, 1]} : vector<16x96xf32> to vector<16x8xf32>
    %31 = vector.shape_cast %30 : vector<16x8xf32> to vector<1x2x8x8xf32>
    %32 = vector.extract_strided_slice %3 {offsets = [0, 88], sizes = [16, 8], strides = [1, 1]} : vector<16x96xf32> to vector<16x8xf32>
    %33 = vector.shape_cast %32 : vector<16x8xf32> to vector<1x2x8x8xf32>
    %34 = tpu.concatenate %27, %29, %31, %33 in 0 : vector<1x2x8x8xf32>, vector<1x2x8x8xf32>, vector<1x2x8x8xf32>, vector<1x2x8x8xf32> -> vector<4x2x8x8xf32>
    %35 = vector.shape_cast %34 : vector<4x2x8x8xf32> to vector<8x8x8xf32>
    "tpu.trace_start"() <{level = 10 : i32, message = "bqd,bkd->bqk"}> : () -> ()
    %cst_5 = arith.constant dense<0.000000e+00> : vector<8x8x8xf32>
    %36 = tpu.matmul %15, %25, %cst_5 {dimension_numbers = #tpu.dot_dimension_numbers<[2], [2], [1], [1], [0, 0, 0, 1, 1, 1], [0], [0]>} : vector<8x8x8xf32>, vector<8x8x8xf32>, vector<8x8x8xf32> -> vector<8x8x8xf32>
    "tpu.trace_stop"() : () -> ()
    %cst_6 = arith.constant dense<0xFF800000> : vector<8x8xf32>
    %37 = vector.multi_reduction <maximumf>, %36, %cst_6 [2] : vector<8x8x8xf32> to vector<8x8xf32>
    %38 = vector.shape_cast %37 : vector<8x8xf32> to vector<8x8x1xf32>
    %39 = vector.broadcast %38 : vector<8x8x1xf32> to vector<8x8x8xf32>
    %40 = arith.subf %36, %39 : vector<8x8x8xf32>
    %41 = math.exp %40 : vector<8x8x8xf32>
    %cst_7 = arith.constant dense<0.000000e+00> : vector<8x8xf32>
    %42 = vector.multi_reduction <add>, %41, %cst_7 [2] : vector<8x8x8xf32> to vector<8x8xf32>
    %43 = vector.shape_cast %42 : vector<8x8xf32> to vector<8x8x1xf32>
    %cst_8 = arith.constant 1.000000e+00 : f32
    %44 = vector.broadcast %cst_8 : f32 to vector<8x8x1xf32>
    %45 = arith.divf %44, %43 : vector<8x8x1xf32>
    %46 = vector.broadcast %45 : vector<8x8x1xf32> to vector<8x8x8xf32>
    %47 = arith.mulf %41, %46 : vector<8x8x8xf32>
    %48 = vector.shape_cast %47 : vector<8x8x8xf32> to vector<4x2x8x8xf32>
    %c0_9 = arith.constant 0 : index
    %c0_10 = arith.constant 0 : index
    %c0_11 = arith.constant 0 : index
    %c0_12 = arith.constant 0 : index
    %49 = vector.load %arg6[%c0_9, %c0_10, %c0_11, %c0_12] : memref<4x2x8x8xf32, #tpu.memory_space<vmem>>, vector<4x2x8x8xf32>
    tpu.vector_store %arg6[%c0_9, %c0_10, %c0_11, %c0_12], %48 {strides = array<i32>} : memref<4x2x8x8xf32, #tpu.memory_space<vmem>>, vector<4x2x8x8xf32>,
    "tpu.trace_start"() <{level = 10 : i32, message = "bqk,bkd->bqd"}> : () -> ()
    %cst_13 = arith.constant dense<0.000000e+00> : vector<8x8x8xf32>
    %50 = tpu.matmul %47, %35, %cst_13 {dimension_numbers = #tpu.dot_dimension_numbers<[2], [1], [1], [2], [0, 0, 0, 1, 1, 2], [0], [0]>} : vector<8x8x8xf32>, vector<8x8x8xf32>, vector<8x8x8xf32> -> vector<8x8x8xf32>
    "tpu.trace_stop"() : () -> ()
    %51 = vector.shape_cast %50 : vector<8x8x8xf32> to vector<4x16x8xf32>
    %c0_14 = arith.constant 0 : index
    %c0_15 = arith.constant 0 : index
    %c0_16 = arith.constant 0 : index
    %52 = vector.load %arg3[%c0_14, %c0_15, %c0_16] : memref<4x8x32xf32, #tpu.memory_space<vmem>>, vector<4x8x32xf32>
    "tpu.trace_start"() <{level = 10 : i32, message = "hmd,hde->hme"}> : () -> ()
    %cst_17 = arith.constant dense<0.000000e+00> : vector<4x16x32xf32>
    %53 = tpu.matmul %51, %52, %cst_17 {dimension_numbers = #tpu.dot_dimension_numbers<[2], [1], [1], [2], [0, 0, 0, 1, 1, 2], [0], [0]>} : vector<4x16x8xf32>, vector<4x8x32xf32>, vector<4x16x32xf32> -> vector<4x16x32xf32>
    "tpu.trace_stop"() : () -> ()
    %cst_18 = arith.constant dense<0.000000e+00> : vector<16x32xf32>
    %54 = vector.multi_reduction <add>, %53, %cst_18 [0] : vector<4x16x32xf32> to vector<16x32xf32>
    %c0_19 = arith.constant 0 : index
    %c0_20 = arith.constant 0 : index
    %55 = vector.load %arg4[%c0_19, %c0_20] : memref<1x32xf32, #tpu.memory_space<vmem>>, vector<1x32xf32>
    %56 = vector.broadcast %55 : vector<1x32xf32> to vector<16x32xf32>
    %57 = arith.addf %54, %56 : vector<16x32xf32>
    %58 = vector.shape_cast %57 : vector<16x32xf32> to vector<2x8x32xf32>
    %c0_21 = arith.constant 0 : index
    %c0_22 = arith.constant 0 : index
    %c0_23 = arith.constant 0 : index
    %59 = vector.load %arg5[%c0_21, %c0_22, %c0_23] : memref<2x8x32xf32, #tpu.memory_space<vmem>>, vector<2x8x32xf32>
    tpu.vector_store %arg5[%c0_21, %c0_22, %c0_23], %58 {strides = array<i32>} : memref<2x8x32xf32, #tpu.memory_space<vmem>>, vector<2x8x32xf32>,
    return
  }
  func.func @transform_0(%arg0: i32) -> (i32, i32, i32) {
    %c0_i32 = arith.constant 0 : i32
    %c0_i32_0 = arith.constant 0 : i32
    %c0_i32_1 = arith.constant 0 : i32
    return %arg0, %c0_i32, %c0_i32_0 : i32, i32, i32
  }
  func.func @transform_1(%arg0: i32) -> (i32, i32) {
    %c0_i32 = arith.constant 0 : i32
    %c0_i32_0 = arith.constant 0 : i32
    %c0_i32_1 = arith.constant 0 : i32
    return %c0_i32, %c0_i32_0 : i32, i32
  }
  func.func @transform_2(%arg0: i32) -> (i32, i32, i32) {
    %c0_i32 = arith.constant 0 : i32
    %c0_i32_0 = arith.constant 0 : i32
    %c0_i32_1 = arith.constant 0 : i32
    %c0_i32_2 = arith.constant 0 : i32
    return %c0_i32, %c0_i32_0, %c0_i32_1 : i32, i32, i32
  }
  func.func @transform_3(%arg0: i32) -> (i32, i32) {
    %c0_i32 = arith.constant 0 : i32
    %c0_i32_0 = arith.constant 0 : i32
    %c0_i32_1 = arith.constant 0 : i32
    return %c0_i32, %c0_i32_0 : i32, i32
  }
  func.func @transform_4(%arg0: i32) -> (i32, i32, i32) {
    %c0_i32 = arith.constant 0 : i32
    %c0_i32_0 = arith.constant 0 : i32
    %c0_i32_1 = arith.constant 0 : i32
    return %arg0, %c0_i32, %c0_i32_0 : i32, i32, i32
  }
  func.func @transform_5(%arg0: i32) -> (i32, i32, i32, i32) {
    %c0_i32 = arith.constant 0 : i32
    %c0_i32_0 = arith.constant 0 : i32
    %c0_i32_1 = arith.constant 0 : i32
    %c0_i32_2 = arith.constant 0 : i32
    return %c0_i32, %arg0, %c0_i32_0, %c0_i32_1 : i32, i32, i32, i32
  }
}

module attributes {stable_mosaic.version = 11 : i64} {
  func.func @_fused_forward_kernel(%arg0: i32, %arg1: memref<2x8x32xf32, #tpu.memory_space<vmem>>, %arg2: memref<32x96xf32, #tpu.memory_space<vmem>>, %arg3: memref<4x8x32xf32, #tpu.memory_space<vmem>>, %arg4: memref<1x32xf32, #tpu.memory_space<vmem>>, %arg5: memref<2x8x32xf32, #tpu.memory_space<vmem>>, %arg6: memref<4x2x8x8xf32, #tpu.memory_space<vmem>>) attributes {dimension_semantics = [#tpu.dimension_semantics<parallel>], iteration_bounds = array<i64: 2>, scalar_prefetch = 0 : i64, scratch_operands = 0 : i64, tpu.core_type = #tpu.core_type<tc>, window_params = [{transform_indices = @transform_0, window_bounds = array<i64: 2, 8, 32>}, {pipeline_mode = #tpu.pipeline_mode<synchronous>, transform_indices = @transform_1, window_bounds = array<i64: 32, 96>}, {pipeline_mode = #tpu.pipeline_mode<synchronous>, transform_indices = @transform_2, window_bounds = array<i64: 4, 8, 32>}, {pipeline_mode = #tpu.pipeline_mode<synchronous>, transform_indices = @transform_3, window_bounds = array<i64: 1, 32>}, {transform_indices = @transform_4, window_bounds = array<i64: 2, 8, 32>}, {transform_indices = @transform_5, window_bounds = array<i64: 4, 2, 8, 8>}]} {
    %c0 = arith.constant 0 : index
    %c0_0 = arith.constant 0 : index
    %c0_1 = arith.constant 0 : index
    %0 = vector.load %arg1[%c0, %c0_0, %c0_1] : memref<2x8x32xf32, #tpu.memory_space<vmem>>, vector<2x8x32xf32>
    %1 = vector.shape_cast %0 : vector<2x8x32xf32> to vector<16x32xf32>
    %c0_2 = arith.constant 0 : index
    %c0_3 = arith.constant 0 : index
    %2 = vector.load %arg2[%c0_2, %c0_3] : memref<32x96xf32, #tpu.memory_space<vmem>>, vector<32x96xf32>
    %cst = arith.constant dense<0.000000e+00> : vector<16x96xf32>
    %3 = tpu.matmul %1, %2, %cst {dimension_numbers = #tpu.dot_dimension_numbers<[1], [0], [0], [1], [0, 0, 1, 1], [], []>} : vector<16x32xf32>, vector<32x96xf32>, vector<16x96xf32> -> vector<16x96xf32>
    %4 = vector.extract_strided_slice %3 {offsets = [0, 0], sizes = [16, 8], strides = [1, 1]} : vector<16x96xf32> to vector<16x8xf32>
    %5 = vector.shape_cast %4 : vector<16x8xf32> to vector<1x2x8x8xf32>
    %6 = vector.extract_strided_slice %3 {offsets = [0, 8], sizes = [16, 8], strides = [1, 1]} : vector<16x96xf32> to vector<16x8xf32>
    %7 = vector.shape_cast %6 : vector<16x8xf32> to vector<1x2x8x8xf32>
    %8 = vector.extract_strided_slice %3 {offsets = [0, 16], sizes = [16, 8], strides = [1, 1]} : vector<16x96xf32> to vector<16x8xf32>
    %9 = vector.shape_cast %8 : vector<16x8xf32> to vector<1x2x8x8xf32>
    %10 = vector.extract_strided_slice %3 {offsets = [0, 24], sizes = [16, 8], strides = [1, 1]} : vector<16x96xf32> to vector<16x8xf32>
    %11 = vector.shape_cast %10 : vector<16x8xf32> to vector<1x2x8x8xf32>
    %12 = tpu.concatenate %5, %7, %9, %11 in 0 : vector<1x2x8x8xf32>, vector<1x2x8x8xf32>, vector<1x2x8x8xf32>, vector<1x2x8x8xf32> -> vector<4x2x8x8xf32>
    %13 = vector.shape_cast %12 : vector<4x2x8x8xf32> to vector<8x8x8xf32>
    %cst_4 = arith.constant 0.353553385 : f32
    %14 = vector.broadcast %cst_4 : f32 to vector<8x8x8xf32>
    %15 = arith.mulf %13, %14 : vector<8x8x8xf32>
    %16 = vector.extract_strided_slice %3 {offsets = [0, 32], sizes = [16, 8], strides = [1, 1]} : vector<16x96xf32> to vector<16x8xf32>
    %17 = vector.shape_cast %16 : vector<16x8xf32> to vector<1x2x8x8xf32>
    %18 = vector.extract_strided_slice %3 {offsets = [0, 40], sizes = [16, 8], strides = [1, 1]} : vector<16x96xf32> to vector<16x8xf32>
    %19 = vector.shape_cast %18 : vector<16x8xf32> to vector<1x2x8x8xf32>
    %20 = vector.extract_strided_slice %3 {offsets = [0, 48], sizes = [16, 8], strides = [1, 1]} : vector<16x96xf32> to vector<16x8xf32>
    %21 = vector.shape_cast %20 : vector<16x8xf32> to vector<1x2x8x8xf32>
    %22 = vector.extract_strided_slice %3 {offsets = [0, 56], sizes = [16, 8], strides = [1, 1]} : vector<16x96xf32> to vector<16x8xf32>
    %23 = vector.shape_cast %22 : vector<16x8xf32> to vector<1x2x8x8xf32>
    %24 = tpu.concatenate %17, %19, %21, %23 in 0 : vector<1x2x8x8xf32>, vector<1x2x8x8xf32>, vector<1x2x8x8xf32>, vector<1x2x8x8xf32> -> vector<4x2x8x8xf32>
    %25 = vector.shape_cast %24 : vector<4x2x8x8xf32> to vector<8x8x8xf32>
    %26 = vector.extract_strided_slice %3 {offsets = [0, 64], sizes = [16, 8], strides = [1, 1]} : vector<16x96xf32> to vector<16x8xf32>
    %27 = vector.shape_cast %26 : vector<16x8xf32> to vector<1x2x8x8xf32>
    %28 = vector.extract_strided_slice %3 {offsets = [0, 72], sizes = [16, 8], strides = [1, 1]} : vector<16x96xf32> to vector<16x8xf32>
    %29 = vector.shape_cast %28 : vector<16x8xf32> to vector<1x2x8x8xf32>
    %30 = vector.extract_strided_slice %3 {offsets = [0, 80], sizes = [16, 8], strides = [1, 1]} : vector<16x96xf32> to vector<16x8xf32>
    %31 = vector.shape_cast %30 : vector<16x8xf32> to vector<1x2x8x8xf32>
    %32 = vector.extract_strided_slice %3 {offsets = [0, 88], sizes = [16, 8], strides = [1, 1]} : vector<16x96xf32> to vector<16x8xf32>
    %33 = vector.shape_cast %32 : vector<16x8xf32> to vector<1x2x8x8xf32>
    %34 = tpu.concatenate %27, %29, %31, %33 in 0 : vector<1x2x8x8xf32>, vector<1x2x8x8xf32>, vector<1x2x8x8xf32>, vector<1x2x8x8xf32> -> vector<4x2x8x8xf32>
    %35 = vector.shape_cast %34 : vector<4x2x8x8xf32> to vector<8x8x8xf32>
    "tpu.trace_start"() <{level = 10 : i32, message = "bqd,bkd->bqk"}> : () -> ()
    %cst_5 = arith.constant dense<0.000000e+00> : vector<8x8x8xf32>
    %36 = tpu.matmul %15, %25, %cst_5 {dimension_numbers = #tpu.dot_dimension_numbers<[2], [2], [1], [1], [0, 0, 0, 1, 1, 1], [0], [0]>} : vector<8x8x8xf32>, vector<8x8x8xf32>, vector<8x8x8xf32> -> vector<8x8x8xf32>
    "tpu.trace_stop"() : () -> ()
    %cst_6 = arith.constant dense<0xFF800000> : vector<8x8xf32>
    %37 = vector.multi_reduction <maximumf>, %36, %cst_6 [2] : vector<8x8x8xf32> to vector<8x8xf32>
    %38 = vector.shape_cast %37 : vector<8x8xf32> to vector<8x8x1xf32>
    %39 = vector.broadcast %38 : vector<8x8x1xf32> to vector<8x8x8xf32>
    %40 = arith.subf %36, %39 : vector<8x8x8xf32>
    %41 = math.exp %40 : vector<8x8x8xf32>
    %cst_7 = arith.constant dense<0.000000e+00> : vector<8x8xf32>
    %42 = vector.multi_reduction <add>, %41, %cst_7 [2] : vector<8x8x8xf32> to vector<8x8xf32>
    %43 = vector.shape_cast %42 : vector<8x8xf32> to vector<8x8x1xf32>
    %cst_8 = arith.constant 1.000000e+00 : f32
    %44 = vector.broadcast %cst_8 : f32 to vector<8x8x1xf32>
    %45 = arith.divf %44, %43 : vector<8x8x1xf32>
    %46 = vector.broadcast %45 : vector<8x8x1xf32> to vector<8x8x8xf32>
    %47 = arith.mulf %41, %46 : vector<8x8x8xf32>
    %48 = vector.shape_cast %47 : vector<8x8x8xf32> to vector<4x2x8x8xf32>
    %c0_9 = arith.constant 0 : index
    %c0_10 = arith.constant 0 : index
    %c0_11 = arith.constant 0 : index
    %c0_12 = arith.constant 0 : index
    %49 = vector.load %arg6[%c0_9, %c0_10, %c0_11, %c0_12] : memref<4x2x8x8xf32, #tpu.memory_space<vmem>>, vector<4x2x8x8xf32>
    tpu.vector_store %arg6[%c0_9, %c0_10, %c0_11, %c0_12], %48 {strides = array<i32>} : memref<4x2x8x8xf32, #tpu.memory_space<vmem>>, vector<4x2x8x8xf32>,
    "tpu.trace_start"() <{level = 10 : i32, message = "bqk,bkd->bqd"}> : () -> ()
    %cst_13 = arith.constant dense<0.000000e+00> : vector<8x8x8xf32>
    %50 = tpu.matmul %47, %35, %cst_13 {dimension_numbers = #tpu.dot_dimension_numbers<[2], [1], [1], [2], [0, 0, 0, 1, 1, 2], [0], [0]>} : vector<8x8x8xf32>, vector<8x8x8xf32>, vector<8x8x8xf32> -> vector<8x8x8xf32>
    "tpu.trace_stop"() : () -> ()
    %51 = vector.shape_cast %50 : vector<8x8x8xf32> to vector<4x16x8xf32>
    %c0_14 = arith.constant 0 : index
    %c0_15 = arith.constant 0 : index
    %c0_16 = arith.constant 0 : index
    %52 = vector.load %arg3[%c0_14, %c0_15, %c0_16] : memref<4x8x32xf32, #tpu.memory_space<vmem>>, vector<4x8x32xf32>
    "tpu.trace_start"() <{level = 10 : i32, message = "hmd,hde->hme"}> : () -> ()
    %cst_17 = arith.constant dense<0.000000e+00> : vector<4x16x32xf32>
    %53 = tpu.matmul %51, %52, %cst_17 {dimension_numbers = #tpu.dot_dimension_numbers<[2], [1], [1], [2], [0, 0, 0, 1, 1, 2], [0], [0]>} : vector<4x16x8xf32>, vector<4x8x32xf32>, vector<4x16x32xf32> -> vector<4x16x32xf32>
    "tpu.trace_stop"() : () -> ()
    %cst_18 = arith.constant dense<0.000000e+00> : vector<16x32xf32>
    %54 = vector.multi_reduction <add>, %53, %cst_18 [0] : vector<4x16x32xf32> to vector<16x32xf32>
    %c0_19 = arith.constant 0 : index
    %c0_20 = arith.constant 0 : index
    %55 = vector.load %arg4[%c0_19, %c0_20] : memref<1x32xf32, #tpu.memory_space<vmem>>, vector<1x32xf32>
    %56 = vector.broadcast %55 : vector<1x32xf32> to vector<16x32xf32>
    %57 = arith.addf %54, %56 : vector<16x32xf32>
    %58 = vector.shape_cast %57 : vector<16x32xf32> to vector<2x8x32xf32>
    %c0_21 = arith.constant 0 : index
    %c0_22 = arith.constant 0 : index
    %c0_23 = arith.constant 0 : index
    %59 = vector.load %arg5[%c0_21, %c0_22, %c0_23] : memref<2x8x32xf32, #tpu.memory_space<vmem>>, vector<2x8x32xf32>
    tpu.vector_store %arg5[%c0_21, %c0_22, %c0_23], %58 {strides = array<i32>} : memref<2x8x32xf32, #tpu.memory_space<vmem>>, vector<2x8x32xf32>,
    return
  }
  func.func @transform_0(%arg0: i32) -> (i32, i32, i32) {
    %c0_i32 = arith.constant 0 : i32
    %c0_i32_0 = arith.constant 0 : i32
    %c0_i32_1 = arith.constant 0 : i32
    return %arg0, %c0_i32, %c0_i32_0 : i32, i32, i32
  }
  func.func @transform_1(%arg0: i32) -> (i32, i32) {
    %c0_i32 = arith.constant 0 : i32
    %c0_i32_0 = arith.constant 0 : i32
    %c0_i32_1 = arith.constant 0 : i32
    return %c0_i32, %c0_i32_0 : i32, i32
  }
  func.func @transform_2(%arg0: i32) -> (i32, i32, i32) {
    %c0_i32 = arith.constant 0 : i32
    %c0_i32_0 = arith.constant 0 : i32
    %c0_i32_1 = arith.constant 0 : i32
    %c0_i32_2 = arith.constant 0 : i32
    return %c0_i32, %c0_i32_0, %c0_i32_1 : i32, i32, i32
  }
  func.func @transform_3(%arg0: i32) -> (i32, i32) {
    %c0_i32 = arith.constant 0 : i32
    %c0_i32_0 = arith.constant 0 : i32
    %c0_i32_1 = arith.constant 0 : i32
    return %c0_i32, %c0_i32_0 : i32, i32
  }
  func.func @transform_4(%arg0: i32) -> (i32, i32, i32) {
    %c0_i32 = arith.constant 0 : i32
    %c0_i32_0 = arith.constant 0 : i32
    %c0_i32_1 = arith.constant 0 : i32
    return %arg0, %c0_i32, %c0_i32_0 : i32, i32, i32
  }
  func.func @transform_5(%arg0: i32) -> (i32, i32, i32, i32) {
    %c0_i32 = arith.constant 0 : i32
    %c0_i32_0 = arith.constant 0 : i32
    %c0_i32_1 = arith.constant 0 : i32
    %c0_i32_2 = arith.constant 0 : i32
    return %c0_i32, %arg0, %c0_i32_0, %c0_i32_1 : i32, i32, i32, i32
  }
}

</mosaic_0001>

<llo_original>
// kernel: tpu_custom_call.1
$region0: #{tpu_custom_call.1}
  #allocation0 [shape = 'u32[]', space=smem, size = 0x4, offset = 0x4, fixed_abs, tag = 'smem constant byte address 0x4 - core index']
  #allocation1 [shape = 'u32[72,128]{1,0:T(1,128)}', space=vmem, size = 0x9000, scoped, tag = 'internal scratch']
  #allocation11 [shape = 's32[]', space=sflag, size = 0x4, offset = 0, fixed_abs, tag = 'sflag constant byte address 0x0 - dummy sync flag']
  %s0 = inlined_call_operand.hbm [shape: f32[4,8,32], index: 0, kind: input, shape index: {}]
  %s1 = inlined_call_operand.hbm [shape: f32[32,96], index: 1, kind: input, shape index: {}]
  %s2 = inlined_call_operand.hbm [shape: f32[4,8,32], index: 2, kind: input, shape index: {}]
  %s3 = inlined_call_operand.vmem [shape: f32[1,32], index: 3, kind: input, shape index: {}]
  %s4 = inlined_call_operand.hbm [shape: f32[4,8,32], index: 4, kind: output, shape index: {0}]
  %s5 = inlined_call_operand.hbm [shape: f32[4,4,8,8], index: 5, kind: output, shape index: {1}]
  %6 = xla_tuple %s4, %s5
  %s7 = sld [smem:[#allocation0]]
  $region69: #{tpu_custom_call.1} parent=0
    _
  %s9 = ssub.s32 1, %s7
  %s10 = scalar_select 0, %s9, %s7
  $region1: #{tpu_custom_call.1} parent=0
    #allocation2 [shape = 'u8[16384]{0}', space=vmem, size = 0x4000, scoped, tag = 'input window, operand 0']
    #allocation3 [shape = 's32[2]{0}', space=sflag, size = 0x8, scoped, tag = 'scoped memory for tpu_custom_call.1']
    #allocation4 [shape = 's32[2]{0}', space=sflag, size = 0x8, scoped, tag = 'scoped memory for tpu_custom_call.1']
    #allocation5 [shape = 'u8[16384]{0}', space=vmem, size = 0x4000, scoped, tag = 'input window, operand 1, single buffered']
    #allocation6 [shape = 's32[1]{0}', space=sflag, size = 0x4, scoped, tag = 'scoped memory for tpu_custom_call.1']
    #allocation7 [shape = 'u8[16384]{0}', space=vmem, size = 0x4000, scoped, tag = 'input window, operand 2, single buffered']
    #allocation8 [shape = 'u8[16384]{0}', space=vmem, size = 0x4000, scoped, tag = 'output window, operand 0']
    #allocation9 [shape = 'u8[65536]{0}', space=vmem, size = 0x10000, scoped, tag = 'output window, operand 1']
    #allocation10 [shape = 's32[2]{0}', space=sflag, size = 0x8, scoped, tag = 'scoped memory for tpu_custom_call.1']
    %11 = vsyncpa [#allocation3], 0
    %s12 = scalar_lea.sflag [#allocation3], 1
    %13 = vsyncpa %s12, 0
    %14 = vsyncpa [#allocation6], 0
    %15 = vsyncpa [#allocation4], 0
    %s16 = scalar_lea.sflag [#allocation4], 1
    %17 = vsyncpa %s16, 0
    %18 = vsyncpa [#allocation10], 0
    %s19 = scalar_lea.sflag [#allocation10], 1
    %20 = vsyncpa %s19, 0
    loop: start=0, step=1, limit=4
    $region2: #{tpu_custom_call.1} parent=1 // loop_pre_header
      _
    $region3: #{tpu_custom_call.1} parent=1 // loop_header
      %s22 = sphi 0, %s26
      %p23 = scmp.ge.s32.totalorder %s22, 4
      %s32 = sphi 0, %s34
      %s35 = sphi 0, %s32
      %s36 = sphi 0, %s35
      %s52 = sphi 0, %s36
      %s56 = sphi 0, %s56
      %s58 = sphi 0, %s56
      %s59 = sphi 0, %s58
      %s73 = sphi 0, %s59
      %s77 = sphi 0, %s77
      %s79 = sphi 0, %s77
      %s80 = sphi 0, %s79
      %s94 = sphi 0, %s80
      %s98 = sphi 0, %s98
      %s100 = sphi 0, %s98
      %s101 = sphi 0, %s100
      %s115 = sphi 0, %s101
      %s121 = sphi 0, %s123
      %s124 = sphi 0, %s121
      %s125 = sphi 0, %s124
      %s141 = sphi 0, %s125
      %s147 = sphi 0, %s149
      %s150 = sphi 0, %s147
      %s151 = sphi 0, %s150
      %s167 = sphi 0, %s151
    $region4: #{tpu_custom_call.1} parent=1 // loop_header_branch
      %25 = sbr.rel (%p23) target = $region8
    $region5: #{tpu_custom_call.1} parent=1 // loop_body
      %s27 = ssub.s32 %s22, 1
      %s28 = ssub.s32 %s22, 2
      %s29 = sadd.s32 %s22, 1
      %s30 = ssub.s32 %s22, %s29
      %p31 = scmp.eq.s32.totalorder %s30, 0
      %s33 = sadd.s32 %s32, 1
      %s34 = scalar_select %p31, %s32, %s33
      %p37 = pneg %p31
      %p38 = scmp.eq.s32.totalorder %s22, 1
      %p39 = por %p37, %p38
      %p40 = scmp.ne.s32.totalorder %s32, %s35
      %p41 = scmp.eq.s32.totalorder %s22, 0
      %p42 = por %p40, %p41
      %p43 = scmp.ne.s32.totalorder %s32, %s35
      %p44 = scmp.eq.s32.totalorder %s27, 1
      %p45 = por %p43, %p44
      %p46 = scmp.ne.s32.totalorder %s35, %s36
      %p47 = scmp.eq.s32.totalorder %s27, 0
      %p48 = por %p46, %p47
      %p49 = scmp.ne.s32.totalorder %s35, %s36
      %p50 = scmp.eq.s32.totalorder %s28, 1
      %p51 = por %p49, %p50
      %p53 = scmp.ne.s32.totalorder %s36, %s52
      %p54 = scmp.eq.s32.totalorder %s28, 0
      %p55 = por %p53, %p54
      %s57 = sadd.s32 %s56, 1
      %p60 = scmp.eq.s32.totalorder %s22, 1
      %p61 = scmp.ne.s32.totalorder %s56, %s58
      %p62 = scmp.eq.s32.totalorder %s22, 0
      %p63 = por %p61, %p62
      %p64 = scmp.ne.s32.totalorder %s56, %s58
      %p65 = scmp.eq.s32.totalorder %s27, 1
      %p66 = por %p64, %p65
      %p67 = scmp.ne.s32.totalorder %s58, %s59
      %p68 = scmp.eq.s32.totalorder %s27, 0
      %p69 = por %p67, %p68
      %p70 = scmp.ne.s32.totalorder %s58, %s59
      %p71 = scmp.eq.s32.totalorder %s28, 1
      %p72 = por %p70, %p71
      %p74 = scmp.ne.s32.totalorder %s59, %s73
      %p75 = scmp.eq.s32.totalorder %s28, 0
      %p76 = por %p74, %p75
      %s78 = sadd.s32 %s77, 1
      %p81 = scmp.eq.s32.totalorder %s22, 1
      %p82 = scmp.ne.s32.totalorder %s77, %s79
      %p83 = scmp.eq.s32.totalorder %s22, 0
      %p84 = por %p82, %p83
      %p85 = scmp.ne.s32.totalorder %s77, %s79
      %p86 = scmp.eq.s32.totalorder %s27, 1
      %p87 = por %p85, %p86
      %p88 = scmp.ne.s32.totalorder %s79, %s80
      %p89 = scmp.eq.s32.totalorder %s27, 0
      %p90 = por %p88, %p89
      %p91 = scmp.ne.s32.totalorder %s79, %s80
      %p92 = scmp.eq.s32.totalorder %s28, 1
      %p93 = por %p91, %p92
      %p95 = scmp.ne.s32.totalorder %s80, %s94
      %p96 = scmp.eq.s32.totalorder %s28, 0
      %p97 = por %p95, %p96
      %s99 = sadd.s32 %s98, 1
      %p102 = scmp.eq.s32.totalorder %s22, 1
      %p103 = scmp.ne.s32.totalorder %s98, %s100
      %p104 = scmp.eq.s32.totalorder %s22, 0
      %p105 = por %p103, %p104
      %p106 = scmp.ne.s32.totalorder %s98, %s100
      %p107 = scmp.eq.s32.totalorder %s27, 1
      %p108 = por %p106, %p107
      %p109 = scmp.ne.s32.totalorder %s100, %s101
      %p110 = scmp.eq.s32.totalorder %s27, 0
      %p111 = por %p109, %p110
      %p112 = scmp.ne.s32.totalorder %s100, %s101
      %p113 = scmp.eq.s32.totalorder %s28, 1
      %p114 = por %p112, %p113
      %p116 = scmp.ne.s32.totalorder %s101, %s115
      %p117 = scmp.eq.s32.totalorder %s28, 0
      %p118 = por %p116, %p117
      %s119 = ssub.s32 %s22, %s29
      %p120 = scmp.eq.s32.totalorder %s119, 0
      %s122 = sadd.s32 %s121, 1
      %s123 = scalar_select %p120, %s121, %s122
      %p126 = pneg %p120
      %p127 = scmp.eq.s32.totalorder %s22, 1
      %p128 = por %p126, %p127
      %p129 = scmp.ne.s32.totalorder %s121, %s124
      %p130 = scmp.eq.s32.totalorder %s22, 0
      %p131 = por %p129, %p130
      %p132 = scmp.ne.s32.totalorder %s121, %s124
      %p133 = scmp.eq.s32.totalorder %s27, 1
      %p134 = por %p132, %p133
      %p135 = scmp.ne.s32.totalorder %s124, %s125
      %p136 = scmp.eq.s32.totalorder %s27, 0
      %p137 = por %p135, %p136
      %p138 = scmp.ne.s32.totalorder %s124, %s125
      %p139 = scmp.eq.s32.totalorder %s28, 1
      %p140 = por %p138, %p139
      %p142 = scmp.ne.s32.totalorder %s125, %s141
      %p143 = scmp.eq.s32.totalorder %s28, 0
      %p144 = por %p142, %p143
      %s145 = ssub.s32 %s22, %s29
      %p146 = scmp.eq.s32.totalorder %s145, 0
      %s148 = sadd.s32 %s147, 1
      %s149 = scalar_select %p146, %s147, %s148
      %p152 = pneg %p146
      %p153 = scmp.eq.s32.totalorder %s22, 1
      %p154 = por %p152, %p153
      %p155 = scmp.ne.s32.totalorder %s147, %s150
      %p156 = scmp.eq.s32.totalorder %s22, 0
      %p157 = por %p155, %p156
      %p158 = scmp.ne.s32.totalorder %s147, %s150
      %p159 = scmp.eq.s32.totalorder %s27, 1
      %p160 = por %p158, %p159
      %p161 = scmp.ne.s32.totalorder %s150, %s151
      %p162 = scmp.eq.s32.totalorder %s27, 0
      %p163 = por %p161, %p162
      %p164 = scmp.ne.s32.totalorder %s150, %s151
      %p165 = scmp.eq.s32.totalorder %s28, 1
      %p166 = por %p164, %p165
      %p168 = scmp.ne.s32.totalorder %s151, %s167
      %p169 = scmp.eq.s32.totalorder %s28, 0
      %p170 = por %p168, %p169
      %p171 = scmp.le.s32.totalorder 1, %s22
      %p172 = scmp.lt.s32.totalorder %s22, 3
      %p173 = pnand %p171, %p172
      %p174 = pneg %p173
      // Predicated region
      $region9: #{tpu_custom_call.1} parent=5 // pred_check
        _
      $region10: #{tpu_custom_call.1} parent=5 // pred_check_branch
        %176 = sbr.rel (%p173) target = $region12
      $region11: #{tpu_custom_call.1} parent=5 // pred_region
        %s177 = ssub.s32 %s22, 1
        // Predicated region
        $region13: #{tpu_custom_call.1} parent=11 // pred_check
          %p178 = pneg %p69
        $region14: #{tpu_custom_call.1} parent=11 // pred_check_branch
          %180 = sbr.rel (%p178) target = $region16
        $region15: #{tpu_custom_call.1} parent=11 // pred_region
          %182 = vsyncadd [#allocation6], 0
          %s183 = sshll.u32 %s1, 4
          %s184 = int_to_ptr.hbm [resolvable:$true] %s183
          %s185 = sshll.u32 [#allocation5], 4
          %s186 = int_to_ptr.vmem [resolvable:$true] %s185
          %191 = dma.hbm_to_vmem [thread:$0]  %s184, 512, %s186, [#allocation6], 128, 128, 8
        $region16: #{tpu_custom_call.1} parent=11 // pred_fallthru
          _
        // Predicated region
        $region17: #{tpu_custom_call.1} parent=11 // pred_check
          %p192 = pneg %p90
        $region18: #{tpu_custom_call.1} parent=11 // pred_check_branch
          %194 = sbr.rel (%p192) target = $region20
        $region19: #{tpu_custom_call.1} parent=11 // pred_region
          %196 = vsyncadd [#allocation6], 0
          %s197 = sshll.u32 %s2, 4
          %s198 = int_to_ptr.hbm [resolvable:$true] %s197
          %s199 = sshll.u32 [#allocation7], 4
          %s200 = int_to_ptr.vmem [resolvable:$true] %s199
          %205 = dma.hbm_to_vmem [thread:$0]  %s198, 512, %s200, [#allocation6], 128, 128, 8
        $region20: #{tpu_custom_call.1} parent=11 // pred_fallthru
          _
        // Predicated region
        $region21: #{tpu_custom_call.1} parent=11 // pred_check
          %p206 = pneg %p111
        $region22: #{tpu_custom_call.1} parent=11 // pred_check_branch
          %208 = sbr.rel (%p206) target = $region24
        $region23: #{tpu_custom_call.1} parent=11 // pred_region
          _
        $region24: #{tpu_custom_call.1} parent=11 // pred_fallthru
          _
      $region12: #{tpu_custom_call.1} parent=5 // pred_fallthru
        _
      %p209 = scmp.lt.s32.totalorder %s22, 2
      // Predicated region
      $region25: #{tpu_custom_call.1} parent=5 // pred_check
        %p210 = pneg %p209
      $region26: #{tpu_custom_call.1} parent=5 // pred_check_branch
        %212 = sbr.rel (%p210) target = $region28
      $region27: #{tpu_custom_call.1} parent=5 // pred_region
        // Predicated region
        $region29: #{tpu_custom_call.1} parent=27 // pred_check
          %p213 = pneg %p42
        $region30: #{tpu_custom_call.1} parent=27 // pred_check_branch
          %215 = sbr.rel (%p213) target = $region32
        $region31: #{tpu_custom_call.1} parent=27 // pred_region
          %s216 = sand.u32 %s32, 1
          %s217 = scalar_lea.sflag [#allocation3], %s216
          %s218 = sand.u32 %s32, 1
          %s219 = smul.addr %s218, 16
          %s220 = scalar_lea.vmem [#allocation2], %s219
          %s221 = smul.u32 2, %s22
          %223 = vsyncadd %s217, 0
          %s224 = smul.addr %s221, 8
          %s225 = scalar_lea.hbm %s0, %s224
          %s226 = sshll.u32 %s225, 4
          %s227 = int_to_ptr.hbm [resolvable:$true] %s226
          %s228 = sshll.u32 %s220, 4
          %s229 = int_to_ptr.vmem [resolvable:$true] %s228
          %234 = dma.hbm_to_vmem [thread:$0]  %s227, 256, %s229, %s217, 128, 128, 8
        $region32: #{tpu_custom_call.1} parent=27 // pred_fallthru
          _
      $region28: #{tpu_custom_call.1} parent=5 // pred_fallthru
        _
      %p235 = scmp.le.s32.totalorder 1, %s22
      %p236 = scmp.lt.s32.totalorder %s22, 3
      %p237 = pnand %p235, %p236
      %p238 = pneg %p237
      // Predicated region
      $region33: #{tpu_custom_call.1} parent=5 // pred_check
        _
      $region34: #{tpu_custom_call.1} parent=5 // pred_check_branch
        %240 = sbr.rel (%p237) target = $region36
      $region35: #{tpu_custom_call.1} parent=5 // pred_region
        %s241 = ssub.s32 %s22, 1
        %s242 = sand.u32 %s35, 1
        %s243 = scalar_lea.sflag [#allocation3], %s242
        %s244 = sand.u32 %s35, 1
        %s245 = smul.addr %s244, 16
        %s246 = scalar_lea.vmem [#allocation2], %s245
        // Predicated region
        $region37: #{tpu_custom_call.1} parent=35 // pred_check
          %p247 = pneg %p48
        $region38: #{tpu_custom_call.1} parent=35 // pred_check_branch
          %249 = sbr.rel (%p247) target = $region40
        $region39: #{tpu_custom_call.1} parent=35 // pred_region
          %251 = dma.done %s243, 256
        $region40: #{tpu_custom_call.1} parent=35 // pred_fallthru
          _
        // Predicated region
        $region41: #{tpu_custom_call.1} parent=35 // pred_check
          %p252 = pneg %p69
        $region42: #{tpu_custom_call.1} parent=35 // pred_check_branch
          %254 = sbr.rel (%p252) target = $region44
        $region43: #{tpu_custom_call.1} parent=35 // pred_region
          %256 = dma.done [#allocation6], 512
        $region44: #{tpu_custom_call.1} parent=35 // pred_fallthru
          _
        // Predicated region
        $region45: #{tpu_custom_call.1} parent=35 // pred_check
          %p257 = pneg %p90
        $region46: #{tpu_custom_call.1} parent=35 // pred_check_branch
          %259 = sbr.rel (%p257) target = $region48
        $region47: #{tpu_custom_call.1} parent=35 // pred_region
          %261 = dma.done [#allocation6], 512
        $region48: #{tpu_custom_call.1} parent=35 // pred_fallthru
          _
        %s262 = sand.u32 %s35, 1
        %s263 = scalar_lea.sflag [#allocation3], %s262
        %s264 = sand.u32 %s35, 1
        %s265 = smul.addr %s264, 16
        %s266 = scalar_lea.vmem [#allocation2], %s265
        %p267 = pneg %p48
        %p268 = pneg %p45
        %p269 = pneg %p69
        %p270 = pneg %p66
        %p271 = pneg %p90
        %p272 = pneg %p87
        %p273 = pneg %p111
        %p274 = pneg %p108
        %p275 = pneg %p137
        %p276 = pneg %p134
        %s277 = sand.u32 %s124, 1
        %s278 = scalar_lea.sflag [#allocation4], %s277
        %s279 = sand.u32 %s124, 1
        %s280 = smul.addr %s279, 16
        %s281 = scalar_lea.vmem [#allocation8], %s280
        %p282 = pneg %p163
        %p283 = pneg %p160
        %s284 = sand.u32 %s150, 1
        %s285 = scalar_lea.sflag [#allocation10], %s284
        %s286 = sand.u32 %s150, 1
        %s287 = smul.addr %s286, 64
        %s288 = scalar_lea.vmem [#allocation9], %s287
        %s289 = smul.u32 2, %s27
        %s290 = smul.u32 2, %s27
        %s291 = smul.u32 2, %s27
        %v292 = vld [vmem:[%s246] sm:$0xff]
        %v293 = vld [vmem:[%s246 + $0x8] sm:$0xff]
        %v294 = vld [vmem:[#allocation5] sm:$0xff]
        %v295 = vld [vmem:[#allocation5 + $0x8] sm:$0xff]
        %v296 = vld [vmem:[#allocation5 + $0x10] sm:$0xff]
        %v297 = vld [vmem:[#allocation5 + $0x18] sm:$0xff]
        %vm298 = vcmask 261120
        %v300 = vsel %vm298, %v292, 0
        %v303 = vsel %vm298, %v293, 0
        %305 = vmatpush.msra.mxu0 0.0
        %306 = vmatpush.msra.mxu0 0.0
        %307 = vmatpush.msra.mxu0 0.0
        %308 = vmatpush.msra.mxu0 0.0
        %309 = vmatpush.msra.mxu0 0.0
        %310 = vmatpush.msra.mxu0 0.0
        %311 = vmatpush.msra.mxu0 0.0
        %312 = vmatpush.msra.mxu0 0.0
        %313 = vmatpush.msra.mxu0 0.0
        %314 = vmatpush.msra.mxu0 0.0
        %315 = vmatpush.msra.mxu0 0.0
        %316 = vmatpush.msra.mxu0 0.0
        %317 = vmatpush.msra.mxu0 %v297
        %318 = vmatpush.msra.mxu0 %v296
        %319 = vmatpush.msra.mxu0 %v295
        %320 = vmatpush.msra.mxu0 %v294
        %321 = vmatmul.f32.gmra.mxu0 %v300
        %v322 = vpop.f32.mrf.mxu0
        %v323 = vadd.f32 0.0, %v322
        %324 = vmatmul.f32.gmra.mxu0 %v303
        %v325 = vpop.f32.mrf.mxu0
        %v326 = vadd.f32 0.0, %v325
        %327 = vdwg.mxu0
        %330 = vrot.lane.b32.xlu0 %v323, 120
        %v331 = vpop.permute.xlu0 %330
        %332 = vrot.lane.b32.xlu0 %v326, 120
        %v333 = vpop.permute.xlu0 %332
        %336 = vrot.lane.b32.xlu0 %v323, 112
        %v337 = vpop.permute.xlu0 %336
        %338 = vrot.lane.b32.xlu0 %v326, 112
        %v339 = vpop.permute.xlu0 %338
        %342 = vrot.lane.b32.xlu0 %v323, 104
        %v343 = vpop.permute.xlu0 %342
        %344 = vrot.lane.b32.xlu0 %v326, 104
        %v345 = vpop.permute.xlu0 %344
        %v348 = vmul.f32 %v323, 0.35355338
        %v349 = vmul.f32 %v326, 0.35355338
        %v350 = vmul.f32 %v331, 0.35355338
        %v351 = vmul.f32 %v333, 0.35355338
        %v352 = vmul.f32 %v337, 0.35355338
        %v353 = vmul.f32 %v339, 0.35355338
        %v354 = vmul.f32 %v343, 0.35355338
        %v355 = vmul.f32 %v345, 0.35355338
        %356 = vrot.lane.b32.xlu0 %v323, 96
        %v357 = vpop.permute.xlu0 %356
        %vm358 = vcmask 64512
        %v360 = vsel %vm358, %v348, 0
        %v362 = vsel %vm358, %v357, 0
        %364 = vmatpush.xpose.msra.mxu0 0.0
        %365 = vmatpush.xpose.msra.mxu0 0.0
        %366 = vmatpush.xpose.msra.mxu0 0.0
        %367 = vmatpush.xpose.msra.mxu0 0.0
        %368 = vmatpush.xpose.msra.mxu0 0.0
        %369 = vmatpush.xpose.msra.mxu0 0.0
        %370 = vmatpush.xpose.msra.mxu0 0.0
        %371 = vmatpush.xpose.msra.mxu0 0.0
        %372 = vmatpush.xpose.msra.mxu0 0.0
        %373 = vmatpush.xpose.msra.mxu0 0.0
        %374 = vmatpush.xpose.msra.mxu0 0.0
        %375 = vmatpush.xpose.msra.mxu0 0.0
        %376 = vmatpush.xpose.msra.mxu0 0.0
        %377 = vmatpush.xpose.msra.mxu0 0.0
        %378 = vmatpush.xpose.msra.mxu0 0.0
        %379 = vmatpush.xpose.msra.mxu0 %v362
        %380 = vmatmul.f32.gmra.mxu0 %v360
        %v381 = vpop.f32.mrf.mxu0
        %v382 = vadd.f32 0.0, %v381
        %383 = vdwg.mxu0
        %384 = vrot.lane.b32.xlu0 %v326, 96
        %v385 = vpop.permute.xlu0 %384
        %v387 = vsel %vm358, %v349, 0
        %v389 = vsel %vm358, %v385, 0
        %391 = vmatpush.xpose.msra.mxu0 0.0
        %392 = vmatpush.xpose.msra.mxu0 0.0
        %393 = vmatpush.xpose.msra.mxu0 0.0
        %394 = vmatpush.xpose.msra.mxu0 0.0
        %395 = vmatpush.xpose.msra.mxu0 0.0
        %396 = vmatpush.xpose.msra.mxu0 0.0
        %397 = vmatpush.xpose.msra.mxu0 0.0
        %398 = vmatpush.xpose.msra.mxu0 0.0
        %399 = vmatpush.xpose.msra.mxu0 0.0
        %400 = vmatpush.xpose.msra.mxu0 0.0
        %401 = vmatpush.xpose.msra.mxu0 0.0
        %402 = vmatpush.xpose.msra.mxu0 0.0
        %403 = vmatpush.xpose.msra.mxu0 0.0
        %404 = vmatpush.xpose.msra.mxu0 0.0
        %405 = vmatpush.xpose.msra.mxu0 0.0
        %406 = vmatpush.xpose.msra.mxu0 %v389
        %407 = vmatmul.f32.gmra.mxu0 %v387
        %v408 = vpop.f32.mrf.mxu0
        %v409 = vadd.f32 0.0, %v408
        %410 = vdwg.mxu0
        %411 = vrot.lane.b32.xlu0 %v331, 96
        %v412 = vpop.permute.xlu0 %411
        %v414 = vsel %vm358, %v350, 0
        %v416 = vsel %vm358, %v412, 0
        %418 = vmatpush.xpose.msra.mxu0 0.0
        %419 = vmatpush.xpose.msra.mxu0 0.0
        %420 = vmatpush.xpose.msra.mxu0 0.0
        %421 = vmatpush.xpose.msra.mxu0 0.0
        %422 = vmatpush.xpose.msra.mxu0 0.0
        %423 = vmatpush.xpose.msra.mxu0 0.0
        %424 = vmatpush.xpose.msra.mxu0 0.0
        %425 = vmatpush.xpose.msra.mxu0 0.0
        %426 = vmatpush.xpose.msra.mxu0 0.0
        %427 = vmatpush.xpose.msra.mxu0 0.0
        %428 = vmatpush.xpose.msra.mxu0 0.0
        %429 = vmatpush.xpose.msra.mxu0 0.0
        %430 = vmatpush.xpose.msra.mxu0 0.0
        %431 = vmatpush.xpose.msra.mxu0 0.0
        %432 = vmatpush.xpose.msra.mxu0 0.0
        %433 = vmatpush.xpose.msra.mxu0 %v416
        %434 = vmatmul.f32.gmra.mxu0 %v414
        %v435 = vpop.f32.mrf.mxu0
        %v436 = vadd.f32 0.0, %v435
        %437 = vdwg.mxu0
        %438 = vrot.lane.b32.xlu0 %v333, 96
        %v439 = vpop.permute.xlu0 %438
        %v441 = vsel %vm358, %v351, 0
        %v443 = vsel %vm358, %v439, 0
        %445 = vmatpush.xpose.msra.mxu0 0.0
        %446 = vmatpush.xpose.msra.mxu0 0.0
        %447 = vmatpush.xpose.msra.mxu0 0.0
        %448 = vmatpush.xpose.msra.mxu0 0.0
        %449 = vmatpush.xpose.msra.mxu0 0.0
        %450 = vmatpush.xpose.msra.mxu0 0.0
        %451 = vmatpush.xpose.msra.mxu0 0.0
        %452 = vmatpush.xpose.msra.mxu0 0.0
        %453 = vmatpush.xpose.msra.mxu0 0.0
        %454 = vmatpush.xpose.msra.mxu0 0.0
        %455 = vmatpush.xpose.msra.mxu0 0.0
        %456 = vmatpush.xpose.msra.mxu0 0.0
        %457 = vmatpush.xpose.msra.mxu0 0.0
        %458 = vmatpush.xpose.msra.mxu0 0.0
        %459 = vmatpush.xpose.msra.mxu0 0.0
        %460 = vmatpush.xpose.msra.mxu0 %v443
        %461 = vmatmul.f32.gmra.mxu0 %v441
        %v462 = vpop.f32.mrf.mxu0
        %v463 = vadd.f32 0.0, %v462
        %464 = vdwg.mxu0
        %465 = vrot.lane.b32.xlu0 %v337, 96
        %v466 = vpop.permute.xlu0 %465
        %v468 = vsel %vm358, %v352, 0
        %v470 = vsel %vm358, %v466, 0
        %472 = vmatpush.xpose.msra.mxu0 0.0
        %473 = vmatpush.xpose.msra.mxu0 0.0
        %474 = vmatpush.xpose.msra.mxu0 0.0
        %475 = vmatpush.xpose.msra.mxu0 0.0
        %476 = vmatpush.xpose.msra.mxu0 0.0
        %477 = vmatpush.xpose.msra.mxu0 0.0
        %478 = vmatpush.xpose.msra.mxu0 0.0
        %479 = vmatpush.xpose.msra.mxu0 0.0
        %480 = vmatpush.xpose.msra.mxu0 0.0
        %481 = vmatpush.xpose.msra.mxu0 0.0
        %482 = vmatpush.xpose.msra.mxu0 0.0
        %483 = vmatpush.xpose.msra.mxu0 0.0
        %484 = vmatpush.xpose.msra.mxu0 0.0
        %485 = vmatpush.xpose.msra.mxu0 0.0
        %486 = vmatpush.xpose.msra.mxu0 0.0
        %487 = vmatpush.xpose.msra.mxu0 %v470
        %488 = vmatmul.f32.gmra.mxu0 %v468
        %v489 = vpop.f32.mrf.mxu0
        %v490 = vadd.f32 0.0, %v489
        %491 = vdwg.mxu0
        %492 = vrot.lane.b32.xlu0 %v339, 96
        %v493 = vpop.permute.xlu0 %492
        %v495 = vsel %vm358, %v353, 0
        %v497 = vsel %vm358, %v493, 0
        %499 = vmatpush.xpose.msra.mxu0 0.0
        %500 = vmatpush.xpose.msra.mxu0 0.0
        %501 = vmatpush.xpose.msra.mxu0 0.0
        %502 = vmatpush.xpose.msra.mxu0 0.0
        %503 = vmatpush.xpose.msra.mxu0 0.0
        %504 = vmatpush.xpose.msra.mxu0 0.0
        %505 = vmatpush.xpose.msra.mxu0 0.0
        %506 = vmatpush.xpose.msra.mxu0 0.0
        %507 = vmatpush.xpose.msra.mxu0 0.0
        %508 = vmatpush.xpose.msra.mxu0 0.0
        %509 = vmatpush.xpose.msra.mxu0 0.0
        %510 = vmatpush.xpose.msra.mxu0 0.0
        %511 = vmatpush.xpose.msra.mxu0 0.0
        %512 = vmatpush.xpose.msra.mxu0 0.0
        %513 = vmatpush.xpose.msra.mxu0 0.0
        %514 = vmatpush.xpose.msra.mxu0 %v497
        %515 = vmatmul.f32.gmra.mxu0 %v495
        %v516 = vpop.f32.mrf.mxu0
        %v517 = vadd.f32 0.0, %v516
        %518 = vdwg.mxu0
        %519 = vrot.lane.b32.xlu0 %v343, 96
        %v520 = vpop.permute.xlu0 %519
        %v522 = vsel %vm358, %v354, 0
        %v524 = vsel %vm358, %v520, 0
        %526 = vmatpush.xpose.msra.mxu0 0.0
        %527 = vmatpush.xpose.msra.mxu0 0.0
        %528 = vmatpush.xpose.msra.mxu0 0.0
        %529 = vmatpush.xpose.msra.mxu0 0.0
        %530 = vmatpush.xpose.msra.mxu0 0.0
        %531 = vmatpush.xpose.msra.mxu0 0.0
        %532 = vmatpush.xpose.msra.mxu0 0.0
        %533 = vmatpush.xpose.msra.mxu0 0.0
        %534 = vmatpush.xpose.msra.mxu0 0.0
        %535 = vmatpush.xpose.msra.mxu0 0.0
        %536 = vmatpush.xpose.msra.mxu0 0.0
        %537 = vmatpush.xpose.msra.mxu0 0.0
        %538 = vmatpush.xpose.msra.mxu0 0.0
        %539 = vmatpush.xpose.msra.mxu0 0.0
        %540 = vmatpush.xpose.msra.mxu0 0.0
        %541 = vmatpush.xpose.msra.mxu0 %v524
        %542 = vmatmul.f32.gmra.mxu0 %v522
        %v543 = vpop.f32.mrf.mxu0
        %v544 = vadd.f32 0.0, %v543
        %545 = vdwg.mxu0
        %546 = vrot.lane.b32.xlu0 %v345, 96
        %v547 = vpop.permute.xlu0 %546
        %v549 = vsel %vm358, %v355, 0
        %v551 = vsel %vm358, %v547, 0
        %553 = vmatpush.xpose.msra.mxu0 0.0
        %554 = vmatpush.xpose.msra.mxu0 0.0
        %555 = vmatpush.xpose.msra.mxu0 0.0
        %556 = vmatpush.xpose.msra.mxu0 0.0
        %557 = vmatpush.xpose.msra.mxu0 0.0
        %558 = vmatpush.xpose.msra.mxu0 0.0
        %559 = vmatpush.xpose.msra.mxu0 0.0
        %560 = vmatpush.xpose.msra.mxu0 0.0
        %561 = vmatpush.xpose.msra.mxu0 0.0
        %562 = vmatpush.xpose.msra.mxu0 0.0
        %563 = vmatpush.xpose.msra.mxu0 0.0
        %564 = vmatpush.xpose.msra.mxu0 0.0
        %565 = vmatpush.xpose.msra.mxu0 0.0
        %566 = vmatpush.xpose.msra.mxu0 0.0
        %567 = vmatpush.xpose.msra.mxu0 0.0
        %568 = vmatpush.xpose.msra.mxu0 %v551
        %569 = vmatmul.f32.gmra.mxu0 %v549
        %v570 = vpop.f32.mrf.mxu0
        %v571 = vadd.f32 0.0, %v570
        %572 = vdwg.mxu0
        %v573 = vsel %vm358, %v382, -inf
        %574 = vmax.xlane.f32.xlu0 %v573
        %v575 = vpop.xlane.xlu0 %574
        %v576 = vsel %vm358, %v409, -inf
        %577 = vmax.xlane.f32.xlu0 %v576
        %v578 = vpop.xlane.xlu0 %577
        %v579 = vsel %vm358, %v436, -inf
        %580 = vmax.xlane.f32.xlu0 %v579
        %v581 = vpop.xlane.xlu0 %580
        %v582 = vsel %vm358, %v463, -inf
        %583 = vmax.xlane.f32.xlu0 %v582
        %v584 = vpop.xlane.xlu0 %583
        %v585 = vsel %vm358, %v490, -inf
        %586 = vmax.xlane.f32.xlu0 %v585
        %v587 = vpop.xlane.xlu0 %586
        %v588 = vsel %vm358, %v517, -inf
        %589 = vmax.xlane.f32.xlu0 %v588
        %v590 = vpop.xlane.xlu0 %589
        %v591 = vsel %vm358, %v544, -inf
        %592 = vmax.xlane.f32.xlu0 %v591
        %v593 = vpop.xlane.xlu0 %592
        %v594 = vsel %vm358, %v571, -inf
        %595 = vmax.xlane.f32.xlu0 %v594
        %v596 = vpop.xlane.xlu0 %595
        %v597 = vsub.f32 %v382, %v575
        %v598 = vsub.f32 %v409, %v578
        %v599 = vsub.f32 %v436, %v581
        %v600 = vsub.f32 %v463, %v584
        %v601 = vsub.f32 %v490, %v587
        %v602 = vsub.f32 %v517, %v590
        %v603 = vsub.f32 %v544, %v593
        %v604 = vsub.f32 %v571, %v596
        %v605 = vmul.f32 %v597, 1.442695
        %v606 = vpow.pop %v605
        %v607 = vmul.f32 %v598, 1.442695
        %v608 = vpow.pop %v607
        %v609 = vmul.f32 %v599, 1.442695
        %v610 = vpow.pop %v609
        %v611 = vmul.f32 %v600, 1.442695
        %v612 = vpow.pop %v611
        %v613 = vmul.f32 %v601, 1.442695
        %v614 = vpow.pop %v613
        %v615 = vmul.f32 %v602, 1.442695
        %v616 = vpow.pop %v615
        %v617 = vmul.f32 %v603, 1.442695
        %v618 = vpow.pop %v617
        %v619 = vmul.f32 %v604, 1.442695
        %v620 = vpow.pop %v619
        %v621 = vsel %vm358, %v606, 0.0
        %622 = vadd.xlane.f32.xlu0 %v621
        %v623 = vpop.xlane.xlu0 %622
        %v624 = vsel %vm358, %v608, 0.0
        %625 = vadd.xlane.f32.xlu0 %v624
        %v626 = vpop.xlane.xlu0 %625
        %v627 = vsel %vm358, %v610, 0.0
        %628 = vadd.xlane.f32.xlu0 %v627
        %v629 = vpop.xlane.xlu0 %628
        %v630 = vsel %vm358, %v612, 0.0
        %631 = vadd.xlane.f32.xlu0 %v630
        %v632 = vpop.xlane.xlu0 %631
        %v633 = vsel %vm358, %v614, 0.0
        %634 = vadd.xlane.f32.xlu0 %v633
        %v635 = vpop.xlane.xlu0 %634
        %v636 = vsel %vm358, %v616, 0.0
        %637 = vadd.xlane.f32.xlu0 %v636
        %v638 = vpop.xlane.xlu0 %637
        %v639 = vsel %vm358, %v618, 0.0
        %640 = vadd.xlane.f32.xlu0 %v639
        %v641 = vpop.xlane.xlu0 %640
        %v642 = vsel %vm358, %v620, 0.0
        %643 = vadd.xlane.f32.xlu0 %v642
        %v644 = vpop.xlane.xlu0 %643
        %v645 = vrcp.pop %v623
        %v646 = vmul.f32 %v623, %v645
        %v647 = vsub.f32 1.0, %v646
        %v648 = vmul.f32 %v645, %v647
        %v649 = vadd.f32 %v645, %v648
        %vm650 = vweird.f32 %v623
        %vm651 = vweird.f32 %v645
        %vm652 = vmor %vm650, %vm651
        %v653 = vsel %vm652, %v645, %v649
        %v654 = vand.u32 2147483647, %v623
        %vm655 = vcmp.eq.f32.partialorder %v654, 8.507059e+37
        %v656 = vand.u32 %v623, 2147483648
        %v657 = vor.u32 1.1754944e-38, %v656
        %v658 = vsel %vm655, %v657, %v653
        %v659 = vmul.f32 1.0, %v658
        %v660 = vrcp.pop %v626
        %v661 = vmul.f32 %v626, %v660
        %v662 = vsub.f32 1.0, %v661
        %v663 = vmul.f32 %v660, %v662
        %v664 = vadd.f32 %v660, %v663
        %vm665 = vweird.f32 %v626
        %vm666 = vweird.f32 %v660
        %vm667 = vmor %vm665, %vm666
        %v668 = vsel %vm667, %v660, %v664
        %v669 = vand.u32 2147483647, %v626
        %vm670 = vcmp.eq.f32.partialorder %v669, 8.507059e+37
        %v671 = vand.u32 %v626, 2147483648
        %v672 = vor.u32 1.1754944e-38, %v671
        %v673 = vsel %vm670, %v672, %v668
        %v674 = vmul.f32 1.0, %v673
        %v675 = vrcp.pop %v629
        %v676 = vmul.f32 %v629, %v675
        %v677 = vsub.f32 1.0, %v676
        %v678 = vmul.f32 %v675, %v677
        %v679 = vadd.f32 %v675, %v678
        %vm680 = vweird.f32 %v629
        %vm681 = vweird.f32 %v675
        %vm682 = vmor %vm680, %vm681
        %v683 = vsel %vm682, %v675, %v679
        %v684 = vand.u32 2147483647, %v629
        %vm685 = vcmp.eq.f32.partialorder %v684, 8.507059e+37
        %v686 = vand.u32 %v629, 2147483648
        %v687 = vor.u32 1.1754944e-38, %v686
        %v688 = vsel %vm685, %v687, %v683
        %v689 = vmul.f32 1.0, %v688
        %v690 = vrcp.pop %v632
        %v691 = vmul.f32 %v632, %v690
        %v692 = vsub.f32 1.0, %v691
        %v693 = vmul.f32 %v690, %v692
        %v694 = vadd.f32 %v690, %v693
        %vm695 = vweird.f32 %v632
        %vm696 = vweird.f32 %v690
        %vm697 = vmor %vm695, %vm696
        %v698 = vsel %vm697, %v690, %v694
        %v699 = vand.u32 2147483647, %v632
        %vm700 = vcmp.eq.f32.partialorder %v699, 8.507059e+37
        %v701 = vand.u32 %v632, 2147483648
        %v702 = vor.u32 1.1754944e-38, %v701
        %v703 = vsel %vm700, %v702, %v698
        %v704 = vmul.f32 1.0, %v703
        %v705 = vrcp.pop %v635
        %v706 = vmul.f32 %v635, %v705
        %v707 = vsub.f32 1.0, %v706
        %v708 = vmul.f32 %v705, %v707
        %v709 = vadd.f32 %v705, %v708
        %vm710 = vweird.f32 %v635
        %vm711 = vweird.f32 %v705
        %vm712 = vmor %vm710, %vm711
        %v713 = vsel %vm712, %v705, %v709
        %v714 = vand.u32 2147483647, %v635
        %vm715 = vcmp.eq.f32.partialorder %v714, 8.507059e+37
        %v716 = vand.u32 %v635, 2147483648
        %v717 = vor.u32 1.1754944e-38, %v716
        %v718 = vsel %vm715, %v717, %v713
        %v719 = vmul.f32 1.0, %v718
        %v720 = vrcp.pop %v638
        %v721 = vmul.f32 %v638, %v720
        %v722 = vsub.f32 1.0, %v721
        %v723 = vmul.f32 %v720, %v722
        %v724 = vadd.f32 %v720, %v723
        %vm725 = vweird.f32 %v638
        %vm726 = vweird.f32 %v720
        %vm727 = vmor %vm725, %vm726
        %v728 = vsel %vm727, %v720, %v724
        %v729 = vand.u32 2147483647, %v638
        %vm730 = vcmp.eq.f32.partialorder %v729, 8.507059e+37
        %v731 = vand.u32 %v638, 2147483648
        %v732 = vor.u32 1.1754944e-38, %v731
        %v733 = vsel %vm730, %v732, %v728
        %v734 = vmul.f32 1.0, %v733
        %v735 = vrcp.pop %v641
        %v736 = vmul.f32 %v641, %v735
        %v737 = vsub.f32 1.0, %v736
        %v738 = vmul.f32 %v735, %v737
        %v739 = vadd.f32 %v735, %v738
        %vm740 = vweird.f32 %v641
        %vm741 = vweird.f32 %v735
        %vm742 = vmor %vm740, %vm741
        %v743 = vsel %vm742, %v735, %v739
        %v744 = vand.u32 2147483647, %v641
        %vm745 = vcmp.eq.f32.partialorder %v744, 8.507059e+37
        %v746 = vand.u32 %v641, 2147483648
        %v747 = vor.u32 1.1754944e-38, %v746
        %v748 = vsel %vm745, %v747, %v743
        %v749 = vmul.f32 1.0, %v748
        %v750 = vrcp.pop %v644
        %v751 = vmul.f32 %v644, %v750
        %v752 = vsub.f32 1.0, %v751
        %v753 = vmul.f32 %v750, %v752
        %v754 = vadd.f32 %v750, %v753
        %vm755 = vweird.f32 %v644
        %vm756 = vweird.f32 %v750
        %vm757 = vmor %vm755, %vm756
        %v758 = vsel %vm757, %v750, %v754
        %v759 = vand.u32 2147483647, %v644
        %vm760 = vcmp.eq.f32.partialorder %v759, 8.507059e+37
        %v761 = vand.u32 %v644, 2147483648
        %v762 = vor.u32 1.1754944e-38, %v761
        %v763 = vsel %vm760, %v762, %v758
        %v764 = vmul.f32 1.0, %v763
        %v765 = vmul.f32 %v606, %v659
        %v766 = vmul.f32 %v608, %v674
        %v767 = vmul.f32 %v610, %v689
        %v768 = vmul.f32 %v612, %v704
        %v769 = vmul.f32 %v614, %v719
        %v770 = vmul.f32 %v616, %v734
        %v771 = vmul.f32 %v618, %v749
        %v772 = vmul.f32 %v620, %v764
        %773 = vst.msk [vmem:[%s288] sm:$0xff] %vm358, %v765
        %774 = vst.msk [vmem:[%s288 + $0x8] sm:$0xff] %vm358, %v766
        %775 = vst.msk [vmem:[%s288 + $0x10] sm:$0xff] %vm358, %v767
        %776 = vst.msk [vmem:[%s288 + $0x18] sm:$0xff] %vm358, %v768
        %777 = vst.msk [vmem:[%s288 + $0x20] sm:$0xff] %vm358, %v769
        %778 = vst.msk [vmem:[%s288 + $0x28] sm:$0xff] %vm358, %v770
        %779 = vst.msk [vmem:[%s288 + $0x30] sm:$0xff] %vm358, %v771
        %780 = vst.msk [vmem:[%s288 + $0x38] sm:$0xff] %vm358, %v772
        %781 = vrot.lane.b32.xlu0 %v323, 64
        %v782 = vpop.permute.xlu0 %781
        %v785 = vsel %vm358, %v765, 0
        %787 = vmatpush.msra.mxu0 0.0
        %788 = vmatpush.msra.mxu0 0.0
        %789 = vmatpush.msra.mxu0 0.0
        %790 = vmatpush.msra.mxu0 0.0
        %791 = vmatpush.msra.mxu0 0.0
        %792 = vmatpush.msra.mxu0 0.0
        %793 = vmatpush.msra.mxu0 0.0
        %794 = vmatpush.msra.mxu0 0.0
        %795 = vmatpush.msra.mxu0 0.0
        %796 = vmatpush.msra.mxu0 0.0
        %797 = vmatpush.msra.mxu0 0.0
        %798 = vmatpush.msra.mxu0 0.0
        %799 = vmatpush.msra.mxu0 0.0
        %800 = vmatpush.msra.mxu0 0.0
        %801 = vmatpush.msra.mxu0 0.0
        %802 = vmatpush.msra.mxu0 %v782
        %803 = vmatmul.f32.gmra.mxu0 %v785
        %v804 = vpop.f32.mrf.mxu0
        %v805 = vadd.f32 0.0, %v804
        %806 = vdwg.mxu0
        %807 = vrot.lane.b32.xlu0 %v326, 64
        %v808 = vpop.permute.xlu0 %807
        %v811 = vsel %vm358, %v766, 0
        %813 = vmatpush.msra.mxu0 0.0
        %814 = vmatpush.msra.mxu0 0.0
        %815 = vmatpush.msra.mxu0 0.0
        %816 = vmatpush.msra.mxu0 0.0
        %817 = vmatpush.msra.mxu0 0.0
        %818 = vmatpush.msra.mxu0 0.0
        %819 = vmatpush.msra.mxu0 0.0
        %820 = vmatpush.msra.mxu0 0.0
        %821 = vmatpush.msra.mxu0 0.0
        %822 = vmatpush.msra.mxu0 0.0
        %823 = vmatpush.msra.mxu0 0.0
        %824 = vmatpush.msra.mxu0 0.0
        %825 = vmatpush.msra.mxu0 0.0
        %826 = vmatpush.msra.mxu0 0.0
        %827 = vmatpush.msra.mxu0 0.0
        %828 = vmatpush.msra.mxu0 %v808
        %829 = vmatmul.f32.gmra.mxu0 %v811
        %v830 = vpop.f32.mrf.mxu0
        %v831 = vadd.f32 0.0, %v830
        %832 = vdwg.mxu0
        %833 = vrot.lane.b32.xlu0 %v331, 64
        %v834 = vpop.permute.xlu0 %833
        %v837 = vsel %vm358, %v767, 0
        %839 = vmatpush.msra.mxu0 0.0
        %840 = vmatpush.msra.mxu0 0.0
        %841 = vmatpush.msra.mxu0 0.0
        %842 = vmatpush.msra.mxu0 0.0
        %843 = vmatpush.msra.mxu0 0.0
        %844 = vmatpush.msra.mxu0 0.0
        %845 = vmatpush.msra.mxu0 0.0
        %846 = vmatpush.msra.mxu0 0.0
        %847 = vmatpush.msra.mxu0 0.0
        %848 = vmatpush.msra.mxu0 0.0
        %849 = vmatpush.msra.mxu0 0.0
        %850 = vmatpush.msra.mxu0 0.0
        %851 = vmatpush.msra.mxu0 0.0
        %852 = vmatpush.msra.mxu0 0.0
        %853 = vmatpush.msra.mxu0 0.0
        %854 = vmatpush.msra.mxu0 %v834
        %855 = vmatmul.f32.gmra.mxu0 %v837
        %v856 = vpop.f32.mrf.mxu0
        %v857 = vadd.f32 0.0, %v856
        %858 = vdwg.mxu0
        %859 = vrot.lane.b32.xlu0 %v333, 64
        %v860 = vpop.permute.xlu0 %859
        %v863 = vsel %vm358, %v768, 0
        %865 = vmatpush.msra.mxu0 0.0
        %866 = vmatpush.msra.mxu0 0.0
        %867 = vmatpush.msra.mxu0 0.0
        %868 = vmatpush.msra.mxu0 0.0
        %869 = vmatpush.msra.mxu0 0.0
        %870 = vmatpush.msra.mxu0 0.0
        %871 = vmatpush.msra.mxu0 0.0
        %872 = vmatpush.msra.mxu0 0.0
        %873 = vmatpush.msra.mxu0 0.0
        %874 = vmatpush.msra.mxu0 0.0
        %875 = vmatpush.msra.mxu0 0.0
        %876 = vmatpush.msra.mxu0 0.0
        %877 = vmatpush.msra.mxu0 0.0
        %878 = vmatpush.msra.mxu0 0.0
        %879 = vmatpush.msra.mxu0 0.0
        %880 = vmatpush.msra.mxu0 %v860
        %881 = vmatmul.f32.gmra.mxu0 %v863
        %v882 = vpop.f32.mrf.mxu0
        %v883 = vadd.f32 0.0, %v882
        %884 = vdwg.mxu0
        %885 = vrot.lane.b32.xlu0 %v337, 64
        %v886 = vpop.permute.xlu0 %885
        %v889 = vsel %vm358, %v769, 0
        %891 = vmatpush.msra.mxu0 0.0
        %892 = vmatpush.msra.mxu0 0.0
        %893 = vmatpush.msra.mxu0 0.0
        %894 = vmatpush.msra.mxu0 0.0
        %895 = vmatpush.msra.mxu0 0.0
        %896 = vmatpush.msra.mxu0 0.0
        %897 = vmatpush.msra.mxu0 0.0
        %898 = vmatpush.msra.mxu0 0.0
        %899 = vmatpush.msra.mxu0 0.0
        %900 = vmatpush.msra.mxu0 0.0
        %901 = vmatpush.msra.mxu0 0.0
        %902 = vmatpush.msra.mxu0 0.0
        %903 = vmatpush.msra.mxu0 0.0
        %904 = vmatpush.msra.mxu0 0.0
        %905 = vmatpush.msra.mxu0 0.0
        %906 = vmatpush.msra.mxu0 %v886
        %907 = vmatmul.f32.gmra.mxu0 %v889
        %v908 = vpop.f32.mrf.mxu0
        %v909 = vadd.f32 0.0, %v908
        %910 = vdwg.mxu0
        %911 = vrot.lane.b32.xlu0 %v339, 64
        %v912 = vpop.permute.xlu0 %911
        %v915 = vsel %vm358, %v770, 0
        %917 = vmatpush.msra.mxu0 0.0
        %918 = vmatpush.msra.mxu0 0.0
        %919 = vmatpush.msra.mxu0 0.0
        %920 = vmatpush.msra.mxu0 0.0
        %921 = vmatpush.msra.mxu0 0.0
        %922 = vmatpush.msra.mxu0 0.0
        %923 = vmatpush.msra.mxu0 0.0
        %924 = vmatpush.msra.mxu0 0.0
        %925 = vmatpush.msra.mxu0 0.0
        %926 = vmatpush.msra.mxu0 0.0
        %927 = vmatpush.msra.mxu0 0.0
        %928 = vmatpush.msra.mxu0 0.0
        %929 = vmatpush.msra.mxu0 0.0
        %930 = vmatpush.msra.mxu0 0.0
        %931 = vmatpush.msra.mxu0 0.0
        %932 = vmatpush.msra.mxu0 %v912
        %933 = vmatmul.f32.gmra.mxu0 %v915
        %v934 = vpop.f32.mrf.mxu0
        %v935 = vadd.f32 0.0, %v934
        %936 = vdwg.mxu0
        %937 = vrot.lane.b32.xlu0 %v343, 64
        %v938 = vpop.permute.xlu0 %937
        %v941 = vsel %vm358, %v771, 0
        %943 = vmatpush.msra.mxu0 0.0
        %944 = vmatpush.msra.mxu0 0.0
        %945 = vmatpush.msra.mxu0 0.0
        %946 = vmatpush.msra.mxu0 0.0
        %947 = vmatpush.msra.mxu0 0.0
        %948 = vmatpush.msra.mxu0 0.0
        %949 = vmatpush.msra.mxu0 0.0
        %950 = vmatpush.msra.mxu0 0.0
        %951 = vmatpush.msra.mxu0 0.0
        %952 = vmatpush.msra.mxu0 0.0
        %953 = vmatpush.msra.mxu0 0.0
        %954 = vmatpush.msra.mxu0 0.0
        %955 = vmatpush.msra.mxu0 0.0
        %956 = vmatpush.msra.mxu0 0.0
        %957 = vmatpush.msra.mxu0 0.0
        %958 = vmatpush.msra.mxu0 %v938
        %959 = vmatmul.f32.gmra.mxu0 %v941
        %v960 = vpop.f32.mrf.mxu0
        %v961 = vadd.f32 0.0, %v960
        %962 = vdwg.mxu0
        %963 = vrot.lane.b32.xlu0 %v345, 64
        %v964 = vpop.permute.xlu0 %963
        %v967 = vsel %vm358, %v772, 0
        %969 = vmatpush.msra.mxu0 0.0
        %970 = vmatpush.msra.mxu0 0.0
        %971 = vmatpush.msra.mxu0 0.0
        %972 = vmatpush.msra.mxu0 0.0
        %973 = vmatpush.msra.mxu0 0.0
        %974 = vmatpush.msra.mxu0 0.0
        %975 = vmatpush.msra.mxu0 0.0
        %976 = vmatpush.msra.mxu0 0.0
        %977 = vmatpush.msra.mxu0 0.0
        %978 = vmatpush.msra.mxu0 0.0
        %979 = vmatpush.msra.mxu0 0.0
        %980 = vmatpush.msra.mxu0 0.0
        %981 = vmatpush.msra.mxu0 0.0
        %982 = vmatpush.msra.mxu0 0.0
        %983 = vmatpush.msra.mxu0 0.0
        %984 = vmatpush.msra.mxu0 %v964
        %985 = vmatmul.f32.gmra.mxu0 %v967
        %v986 = vpop.f32.mrf.mxu0
        %v987 = vadd.f32 0.0, %v986
        %988 = vdwg.mxu0
        %v989 = vld [vmem:[#allocation7] sm:$0xff]
        %v990 = vld [vmem:[#allocation7 + $0x8] sm:$0xff]
        %v991 = vld [vmem:[#allocation7 + $0x10] sm:$0xff]
        %v992 = vld [vmem:[#allocation7 + $0x18] sm:$0xff]
        %v994 = vsel %vm358, %v805, 0
        %v997 = vsel %vm358, %v831, 0
        %999 = vmatpush.msra.mxu0 0.0
        %1000 = vmatpush.msra.mxu0 0.0
        %1001 = vmatpush.msra.mxu0 0.0
        %1002 = vmatpush.msra.mxu0 0.0
        %1003 = vmatpush.msra.mxu0 0.0
        %1004 = vmatpush.msra.mxu0 0.0
        %1005 = vmatpush.msra.mxu0 0.0
        %1006 = vmatpush.msra.mxu0 0.0
        %1007 = vmatpush.msra.mxu0 0.0
        %1008 = vmatpush.msra.mxu0 0.0
        %1009 = vmatpush.msra.mxu0 0.0
        %1010 = vmatpush.msra.mxu0 0.0
        %1011 = vmatpush.msra.mxu0 0.0
        %1012 = vmatpush.msra.mxu0 0.0
        %1013 = vmatpush.msra.mxu0 0.0
        %1014 = vmatpush.msra.mxu0 %v989
        %1015 = vmatmul.f32.gmra.mxu0 %v994
        %v1016 = vpop.f32.mrf.mxu0
        %v1017 = vadd.f32 0.0, %v1016
        %1018 = vmatmul.f32.gmra.mxu0 %v997
        %v1019 = vpop.f32.mrf.mxu0
        %v1020 = vadd.f32 0.0, %v1019
        %1021 = vdwg.mxu0
        %v1023 = vsel %vm358, %v857, 0
        %v1026 = vsel %vm358, %v883, 0
        %1028 = vmatpush.msra.mxu0 0.0
        %1029 = vmatpush.msra.mxu0 0.0
        %1030 = vmatpush.msra.mxu0 0.0
        %1031 = vmatpush.msra.mxu0 0.0
        %1032 = vmatpush.msra.mxu0 0.0
        %1033 = vmatpush.msra.mxu0 0.0
        %1034 = vmatpush.msra.mxu0 0.0
        %1035 = vmatpush.msra.mxu0 0.0
        %1036 = vmatpush.msra.mxu0 0.0
        %1037 = vmatpush.msra.mxu0 0.0
        %1038 = vmatpush.msra.mxu0 0.0
        %1039 = vmatpush.msra.mxu0 0.0
        %1040 = vmatpush.msra.mxu0 0.0
        %1041 = vmatpush.msra.mxu0 0.0
        %1042 = vmatpush.msra.mxu0 0.0
        %1043 = vmatpush.msra.mxu0 %v990
        %1044 = vmatmul.f32.gmra.mxu0 %v1023
        %v1045 = vpop.f32.mrf.mxu0
        %v1046 = vadd.f32 0.0, %v1045
        %1047 = vmatmul.f32.gmra.mxu0 %v1026
        %v1048 = vpop.f32.mrf.mxu0
        %v1049 = vadd.f32 0.0, %v1048
        %1050 = vdwg.mxu0
        %v1052 = vsel %vm358, %v909, 0
        %v1055 = vsel %vm358, %v935, 0
        %1057 = vmatpush.msra.mxu0 0.0
        %1058 = vmatpush.msra.mxu0 0.0
        %1059 = vmatpush.msra.mxu0 0.0
        %1060 = vmatpush.msra.mxu0 0.0
        %1061 = vmatpush.msra.mxu0 0.0
        %1062 = vmatpush.msra.mxu0 0.0
        %1063 = vmatpush.msra.mxu0 0.0
        %1064 = vmatpush.msra.mxu0 0.0
        %1065 = vmatpush.msra.mxu0 0.0
        %1066 = vmatpush.msra.mxu0 0.0
        %1067 = vmatpush.msra.mxu0 0.0
        %1068 = vmatpush.msra.mxu0 0.0
        %1069 = vmatpush.msra.mxu0 0.0
        %1070 = vmatpush.msra.mxu0 0.0
        %1071 = vmatpush.msra.mxu0 0.0
        %1072 = vmatpush.msra.mxu0 %v991
        %1073 = vmatmul.f32.gmra.mxu0 %v1052
        %v1074 = vpop.f32.mrf.mxu0
        %v1075 = vadd.f32 0.0, %v1074
        %1076 = vmatmul.f32.gmra.mxu0 %v1055
        %v1077 = vpop.f32.mrf.mxu0
        %v1078 = vadd.f32 0.0, %v1077
        %1079 = vdwg.mxu0
        %v1081 = vsel %vm358, %v961, 0
        %v1084 = vsel %vm358, %v987, 0
        %1086 = vmatpush.msra.mxu0 0.0
        %1087 = vmatpush.msra.mxu0 0.0
        %1088 = vmatpush.msra.mxu0 0.0
        %1089 = vmatpush.msra.mxu0 0.0
        %1090 = vmatpush.msra.mxu0 0.0
        %1091 = vmatpush.msra.mxu0 0.0
        %1092 = vmatpush.msra.mxu0 0.0
        %1093 = vmatpush.msra.mxu0 0.0
        %1094 = vmatpush.msra.mxu0 0.0
        %1095 = vmatpush.msra.mxu0 0.0
        %1096 = vmatpush.msra.mxu0 0.0
        %1097 = vmatpush.msra.mxu0 0.0
        %1098 = vmatpush.msra.mxu0 0.0
        %1099 = vmatpush.msra.mxu0 0.0
        %1100 = vmatpush.msra.mxu0 0.0
        %1101 = vmatpush.msra.mxu0 %v992
        %1102 = vmatmul.f32.gmra.mxu0 %v1081
        %v1103 = vpop.f32.mrf.mxu0
        %v1104 = vadd.f32 0.0, %v1103
        %1105 = vmatmul.f32.gmra.mxu0 %v1084
        %v1106 = vpop.f32.mrf.mxu0
        %v1107 = vadd.f32 0.0, %v1106
        %1108 = vdwg.mxu0
        %v1109 = vsel %vm298, %v1017, 0.0
        %v1110 = vsel %vm298, %v1046, 0.0
        %v1111 = vadd.f32 %v1109, %v1110
        %v1112 = vsel %vm298, %v1075, 0.0
        %v1113 = vadd.f32 %v1111, %v1112
        %v1114 = vsel %vm298, %v1104, 0.0
        %v1115 = vadd.f32 %v1113, %v1114
        %v1116 = vsel %vm298, %v1020, 0.0
        %v1117 = vsel %vm298, %v1049, 0.0
        %v1118 = vadd.f32 %v1116, %v1117
        %v1119 = vsel %vm298, %v1078, 0.0
        %v1120 = vadd.f32 %v1118, %v1119
        %v1121 = vsel %vm298, %v1107, 0.0
        %v1122 = vadd.f32 %v1120, %v1121
        %v1123 = vld [vmem:[%s3] sm:$0x1]
        %v1125 = vperm.slane %v1123, 0
        %v1127 = vadd.f32 %v1115, %v1125
        %v1128 = vadd.f32 %v1122, %v1125
        %1129 = vst.msk [vmem:[%s281] sm:$0xff] %vm298, %v1127
        %1130 = vst.msk [vmem:[%s281 + $0x8] sm:$0xff] %vm298, %v1128
        %s1131 = sand.u32 %s124, 1
        %s1132 = scalar_lea.sflag [#allocation4], %s1131
        %s1133 = sand.u32 %s124, 1
        %s1134 = smul.addr %s1133, 16
        %s1135 = scalar_lea.vmem [#allocation8], %s1134
        %s1136 = sand.u32 %s150, 1
        %s1137 = scalar_lea.sflag [#allocation10], %s1136
        %s1138 = sand.u32 %s150, 1
        %s1139 = smul.addr %s1138, 64
        %s1140 = scalar_lea.vmem [#allocation9], %s1139
        // Predicated region
        $region49: #{tpu_custom_call.1} parent=35 // pred_check
          %p1141 = pneg %p134
        $region50: #{tpu_custom_call.1} parent=35 // pred_check_branch
          %1143 = sbr.rel (%p1141) target = $region52
        $region51: #{tpu_custom_call.1} parent=35 // pred_region
          %s1144 = smul.u32 2, %s27
          %1146 = vsyncadd %s1132, 0
          %s1147 = smul.addr %s1144, 8
          %s1148 = scalar_lea.hbm %s4, %s1147
          %s1149 = sshll.u32 %s1135, 4
          %s1150 = int_to_ptr.vmem [resolvable:$true] %s1149
          %s1151 = sshll.u32 %s1148, 4
          %s1152 = int_to_ptr.hbm [resolvable:$true] %s1151
          %1157 = dma.vmem_to_hbm [thread:$0]  %s1150, 256, %s1152, %s1132, 128, 128, 8
        $region52: #{tpu_custom_call.1} parent=35 // pred_fallthru
          _
        // Predicated region
        $region53: #{tpu_custom_call.1} parent=35 // pred_check
          %p1158 = pneg %p160
        $region54: #{tpu_custom_call.1} parent=35 // pred_check_branch
          %1160 = sbr.rel (%p1158) target = $region56
        $region55: #{tpu_custom_call.1} parent=35 // pred_region
          #allocation12 [shape = 'u32[6]{0}', space=smem, size = 0x18, scoped, tag = 'DMA stride descriptor']
          %s1161 = smul.u32 2, %s27
          %1163 = vsyncadd %s1137, 0
          %s1164 = smul.addr %s1161, 8
          %s1165 = scalar_lea.hbm %s5, %s1164
          %s1167 = sshll.u32 1, 14
          %s1168 = sxor.u32 4294967295, %s1167
          %s1171 = sshll.u32 7, 18
          %s1172 = sxor.u32 4294967295, %s1171
          %s1173 = sand.u32 0, %s1172
          %s1175 = sor.u32 %s1173, 0
          %s1176 = sshll.u32 %s1140, 4
          %s1177 = int_to_ptr.vmem [resolvable:$true] %s1176
          %s1178 = sshll.u32 %s1165, 4
          %s1179 = int_to_ptr.hbm [resolvable:$true] %s1178
          %1185 = sst [smem:[#allocation12]] 256
          %s1186 = scalar_lea.smem [#allocation12], 1
          %1187 = sst [smem:[%s1186]] 512
          %s1188 = scalar_lea.smem [#allocation12], 2
          %1189 = sst [smem:[%s1188]] 2
          %s1190 = scalar_lea.smem [#allocation12], 3
          %1191 = sst [smem:[%s1190]] 128
          %s1192 = scalar_lea.smem [#allocation12], 4
          %1193 = sst [smem:[%s1192]] 128
          %s1194 = scalar_lea.smem [#allocation12], 5
          %1195 = sst [smem:[%s1194]] 8
          %1197 = dma.general %s1177, 1024, %s1179, %s1137, [#allocation11], [#allocation12], %s1175, 0
        $region56: #{tpu_custom_call.1} parent=35 // pred_fallthru
          _
      $region36: #{tpu_custom_call.1} parent=5 // pred_fallthru
        _
      %p1198 = scmp.le.s32.totalorder 2, %s22
      // Predicated region
      $region57: #{tpu_custom_call.1} parent=5 // pred_check
        %p1199 = pneg %p1198
      $region58: #{tpu_custom_call.1} parent=5 // pred_check_branch
        %1201 = sbr.rel (%p1199) target = $region60
      $region59: #{tpu_custom_call.1} parent=5 // pred_region
        %s1202 = ssub.s32 %s22, 2
        // Predicated region
        $region61: #{tpu_custom_call.1} parent=59 // pred_check
          %p1203 = pneg %p140
        $region62: #{tpu_custom_call.1} parent=59 // pred_check_branch
          %1205 = sbr.rel (%p1203) target = $region64
        $region63: #{tpu_custom_call.1} parent=59 // pred_region
          %s1206 = sand.u32 %s125, 1
          %s1207 = scalar_lea.sflag [#allocation4], %s1206
          %s1208 = sand.u32 %s125, 1
          %s1209 = smul.addr %s1208, 16
          %s1210 = scalar_lea.vmem [#allocation8], %s1209
          %1212 = dma.done %s1207, 256
        $region64: #{tpu_custom_call.1} parent=59 // pred_fallthru
          _
        // Predicated region
        $region65: #{tpu_custom_call.1} parent=59 // pred_check
          %p1213 = pneg %p166
        $region66: #{tpu_custom_call.1} parent=59 // pred_check_branch
          %1215 = sbr.rel (%p1213) target = $region68
        $region67: #{tpu_custom_call.1} parent=59 // pred_region
          %s1216 = sand.u32 %s151, 1
          %s1217 = scalar_lea.sflag [#allocation10], %s1216
          %s1218 = sand.u32 %s151, 1
          %s1219 = smul.addr %s1218, 64
          %s1220 = scalar_lea.vmem [#allocation9], %s1219
          %1222 = dma.done %s1217, 1024
        $region68: #{tpu_custom_call.1} parent=59 // pred_fallthru
          _
      $region60: #{tpu_custom_call.1} parent=5 // pred_fallthru
        _
    $region6: #{tpu_custom_call.1} parent=1 // loop_footer
      %s26 = sadd.s32 1, %s22
    $region7: #{tpu_custom_call.1} parent=1 // loop_footer_branch
      %21 = sbr.rel target = $region3
    $region8: #{tpu_custom_call.1} parent=1 // loop_exit
      _
    %1223 = vsyncpa [#allocation3], 1
    %s1224 = scalar_lea.sflag [#allocation3], 1
    %1225 = vsyncpa %s1224, 1
    %1226 = vsyncpa [#allocation6], 1
    %1227 = vsyncpa [#allocation4], 1
    %s1228 = scalar_lea.sflag [#allocation4], 1
    %1229 = vsyncpa %s1228, 1
    %1230 = vsyncpa [#allocation10], 1
    %s1231 = scalar_lea.sflag [#allocation10], 1
    %1232 = vsyncpa %s1231, 1

// kernel: tpu_custom_call.1
$region0: #{tpu_custom_call.1}
  #allocation0 [shape = 'u32[]', space=smem, size = 0x4, offset = 0x4, fixed_abs, tag = 'smem constant byte address 0x4 - core index']
  #allocation1 [shape = 'u32[72,128]{1,0:T(1,128)}', space=vmem, size = 0x9000, scoped, tag = 'internal scratch']
  #allocation11 [shape = 's32[]', space=sflag, size = 0x4, offset = 0, fixed_abs, tag = 'sflag constant byte address 0x0 - dummy sync flag']
  %s0 = inlined_call_operand.hbm [shape: f32[4,8,32], index: 0, kind: input, shape index: {}]
  %s1 = inlined_call_operand.hbm [shape: f32[32,96], index: 1, kind: input, shape index: {}]
  %s2 = inlined_call_operand.hbm [shape: f32[4,8,32], index: 2, kind: input, shape index: {}]
  %s3 = inlined_call_operand.vmem [shape: f32[1,32], index: 3, kind: input, shape index: {}]
  %s4 = inlined_call_operand.hbm [shape: f32[4,8,32], index: 4, kind: output, shape index: {0}]
  %s5 = inlined_call_operand.hbm [shape: f32[4,4,8,8], index: 5, kind: output, shape index: {1}]
  %6 = xla_tuple %s4, %s5
  %s7 = sld [smem:[#allocation0]]
  $region69: #{tpu_custom_call.1} parent=0
    _
  %s9 = ssub.s32 1, %s7
  %s10 = scalar_select 0, %s9, %s7
  $region1: #{tpu_custom_call.1} parent=0
    #allocation2 [shape = 'u8[16384]{0}', space=vmem, size = 0x4000, scoped, tag = 'input window, operand 0']
    #allocation3 [shape = 's32[2]{0}', space=sflag, size = 0x8, scoped, tag = 'scoped memory for tpu_custom_call.1']
    #allocation4 [shape = 's32[2]{0}', space=sflag, size = 0x8, scoped, tag = 'scoped memory for tpu_custom_call.1']
    #allocation5 [shape = 'u8[16384]{0}', space=vmem, size = 0x4000, scoped, tag = 'input window, operand 1, single buffered']
    #allocation6 [shape = 's32[1]{0}', space=sflag, size = 0x4, scoped, tag = 'scoped memory for tpu_custom_call.1']
    #allocation7 [shape = 'u8[16384]{0}', space=vmem, size = 0x4000, scoped, tag = 'input window, operand 2, single buffered']
    #allocation8 [shape = 'u8[16384]{0}', space=vmem, size = 0x4000, scoped, tag = 'output window, operand 0']
    #allocation9 [shape = 'u8[65536]{0}', space=vmem, size = 0x10000, scoped, tag = 'output window, operand 1']
    #allocation10 [shape = 's32[2]{0}', space=sflag, size = 0x8, scoped, tag = 'scoped memory for tpu_custom_call.1']
    %11 = vsyncpa [#allocation3], 0
    %s12 = scalar_lea.sflag [#allocation3], 1
    %13 = vsyncpa %s12, 0
    %14 = vsyncpa [#allocation6], 0
    %15 = vsyncpa [#allocation4], 0
    %s16 = scalar_lea.sflag [#allocation4], 1
    %17 = vsyncpa %s16, 0
    %18 = vsyncpa [#allocation10], 0
    %s19 = scalar_lea.sflag [#allocation10], 1
    %20 = vsyncpa %s19, 0
    loop: start=0, step=1, limit=4
    $region2: #{tpu_custom_call.1} parent=1 // loop_pre_header
      _
    $region3: #{tpu_custom_call.1} parent=1 // loop_header
      %s22 = sphi 0, %s26
      %p23 = scmp.ge.s32.totalorder %s22, 4
      %s32 = sphi 0, %s34
      %s35 = sphi 0, %s32
      %s36 = sphi 0, %s35
      %s52 = sphi 0, %s36
      %s56 = sphi 0, %s56
      %s58 = sphi 0, %s56
      %s59 = sphi 0, %s58
      %s73 = sphi 0, %s59
      %s77 = sphi 0, %s77
      %s79 = sphi 0, %s77
      %s80 = sphi 0, %s79
      %s94 = sphi 0, %s80
      %s98 = sphi 0, %s98
      %s100 = sphi 0, %s98
      %s101 = sphi 0, %s100
      %s115 = sphi 0, %s101
      %s121 = sphi 0, %s123
      %s124 = sphi 0, %s121
      %s125 = sphi 0, %s124
      %s141 = sphi 0, %s125
      %s147 = sphi 0, %s149
      %s150 = sphi 0, %s147
      %s151 = sphi 0, %s150
      %s167 = sphi 0, %s151
    $region4: #{tpu_custom_call.1} parent=1 // loop_header_branch
      %25 = sbr.rel (%p23) target = $region8
    $region5: #{tpu_custom_call.1} parent=1 // loop_body
      %s27 = ssub.s32 %s22, 1
      %s28 = ssub.s32 %s22, 2
      %s29 = sadd.s32 %s22, 1
      %s30 = ssub.s32 %s22, %s29
      %p31 = scmp.eq.s32.totalorder %s30, 0
      %s33 = sadd.s32 %s32, 1
      %s34 = scalar_select %p31, %s32, %s33
      %p37 = pneg %p31
      %p38 = scmp.eq.s32.totalorder %s22, 1
      %p39 = por %p37, %p38
      %p40 = scmp.ne.s32.totalorder %s32, %s35
      %p41 = scmp.eq.s32.totalorder %s22, 0
      %p42 = por %p40, %p41
      %p43 = scmp.ne.s32.totalorder %s32, %s35
      %p44 = scmp.eq.s32.totalorder %s27, 1
      %p45 = por %p43, %p44
      %p46 = scmp.ne.s32.totalorder %s35, %s36
      %p47 = scmp.eq.s32.totalorder %s27, 0
      %p48 = por %p46, %p47
      %p49 = scmp.ne.s32.totalorder %s35, %s36
      %p50 = scmp.eq.s32.totalorder %s28, 1
      %p51 = por %p49, %p50
      %p53 = scmp.ne.s32.totalorder %s36, %s52
      %p54 = scmp.eq.s32.totalorder %s28, 0
      %p55 = por %p53, %p54
      %s57 = sadd.s32 %s56, 1
      %p60 = scmp.eq.s32.totalorder %s22, 1
      %p61 = scmp.ne.s32.totalorder %s56, %s58
      %p62 = scmp.eq.s32.totalorder %s22, 0
      %p63 = por %p61, %p62
      %p64 = scmp.ne.s32.totalorder %s56, %s58
      %p65 = scmp.eq.s32.totalorder %s27, 1
      %p66 = por %p64, %p65
      %p67 = scmp.ne.s32.totalorder %s58, %s59
      %p68 = scmp.eq.s32.totalorder %s27, 0
      %p69 = por %p67, %p68
      %p70 = scmp.ne.s32.totalorder %s58, %s59
      %p71 = scmp.eq.s32.totalorder %s28, 1
      %p72 = por %p70, %p71
      %p74 = scmp.ne.s32.totalorder %s59, %s73
      %p75 = scmp.eq.s32.totalorder %s28, 0
      %p76 = por %p74, %p75
      %s78 = sadd.s32 %s77, 1
      %p81 = scmp.eq.s32.totalorder %s22, 1
      %p82 = scmp.ne.s32.totalorder %s77, %s79
      %p83 = scmp.eq.s32.totalorder %s22, 0
      %p84 = por %p82, %p83
      %p85 = scmp.ne.s32.totalorder %s77, %s79
      %p86 = scmp.eq.s32.totalorder %s27, 1
      %p87 = por %p85, %p86
      %p88 = scmp.ne.s32.totalorder %s79, %s80
      %p89 = scmp.eq.s32.totalorder %s27, 0
      %p90 = por %p88, %p89
      %p91 = scmp.ne.s32.totalorder %s79, %s80
      %p92 = scmp.eq.s32.totalorder %s28, 1
      %p93 = por %p91, %p92
      %p95 = scmp.ne.s32.totalorder %s80, %s94
      %p96 = scmp.eq.s32.totalorder %s28, 0
      %p97 = por %p95, %p96
      %s99 = sadd.s32 %s98, 1
      %p102 = scmp.eq.s32.totalorder %s22, 1
      %p103 = scmp.ne.s32.totalorder %s98, %s100
      %p104 = scmp.eq.s32.totalorder %s22, 0
      %p105 = por %p103, %p104
      %p106 = scmp.ne.s32.totalorder %s98, %s100
      %p107 = scmp.eq.s32.totalorder %s27, 1
      %p108 = por %p106, %p107
      %p109 = scmp.ne.s32.totalorder %s100, %s101
      %p110 = scmp.eq.s32.totalorder %s27, 0
      %p111 = por %p109, %p110
      %p112 = scmp.ne.s32.totalorder %s100, %s101
      %p113 = scmp.eq.s32.totalorder %s28, 1
      %p114 = por %p112, %p113
      %p116 = scmp.ne.s32.totalorder %s101, %s115
      %p117 = scmp.eq.s32.totalorder %s28, 0
      %p118 = por %p116, %p117
      %s119 = ssub.s32 %s22, %s29
      %p120 = scmp.eq.s32.totalorder %s119, 0
      %s122 = sadd.s32 %s121, 1
      %s123 = scalar_select %p120, %s121, %s122
      %p126 = pneg %p120
      %p127 = scmp.eq.s32.totalorder %s22, 1
      %p128 = por %p126, %p127
      %p129 = scmp.ne.s32.totalorder %s121, %s124
      %p130 = scmp.eq.s32.totalorder %s22, 0
      %p131 = por %p129, %p130
      %p132 = scmp.ne.s32.totalorder %s121, %s124
      %p133 = scmp.eq.s32.totalorder %s27, 1
      %p134 = por %p132, %p133
      %p135 = scmp.ne.s32.totalorder %s124, %s125
      %p136 = scmp.eq.s32.totalorder %s27, 0
      %p137 = por %p135, %p136
      %p138 = scmp.ne.s32.totalorder %s124, %s125
      %p139 = scmp.eq.s32.totalorder %s28, 1
      %p140 = por %p138, %p139
      %p142 = scmp.ne.s32.totalorder %s125, %s141
      %p143 = scmp.eq.s32.totalorder %s28, 0
      %p144 = por %p142, %p143
      %s145 = ssub.s32 %s22, %s29
      %p146 = scmp.eq.s32.totalorder %s145, 0
      %s148 = sadd.s32 %s147, 1
      %s149 = scalar_select %p146, %s147, %s148
      %p152 = pneg %p146
      %p153 = scmp.eq.s32.totalorder %s22, 1
      %p154 = por %p152, %p153
      %p155 = scmp.ne.s32.totalorder %s147, %s150
      %p156 = scmp.eq.s32.totalorder %s22, 0
      %p157 = por %p155, %p156
      %p158 = scmp.ne.s32.totalorder %s147, %s150
      %p159 = scmp.eq.s32.totalorder %s27, 1
      %p160 = por %p158, %p159
      %p161 = scmp.ne.s32.totalorder %s150, %s151
      %p162 = scmp.eq.s32.totalorder %s27, 0
      %p163 = por %p161, %p162
      %p164 = scmp.ne.s32.totalorder %s150, %s151
      %p165 = scmp.eq.s32.totalorder %s28, 1
      %p166 = por %p164, %p165
      %p168 = scmp.ne.s32.totalorder %s151, %s167
      %p169 = scmp.eq.s32.totalorder %s28, 0
      %p170 = por %p168, %p169
      %p171 = scmp.le.s32.totalorder 1, %s22
      %p172 = scmp.lt.s32.totalorder %s22, 3
      %p173 = pnand %p171, %p172
      %p174 = pneg %p173
      // Predicated region
      $region9: #{tpu_custom_call.1} parent=5 // pred_check
        _
      $region10: #{tpu_custom_call.1} parent=5 // pred_check_branch
        %176 = sbr.rel (%p173) target = $region12
      $region11: #{tpu_custom_call.1} parent=5 // pred_region
        %s177 = ssub.s32 %s22, 1
        // Predicated region
        $region13: #{tpu_custom_call.1} parent=11 // pred_check
          %p178 = pneg %p69
        $region14: #{tpu_custom_call.1} parent=11 // pred_check_branch
          %180 = sbr.rel (%p178) target = $region16
        $region15: #{tpu_custom_call.1} parent=11 // pred_region
          %182 = vsyncadd [#allocation6], 0
          %s183 = sshll.u32 %s1, 4
          %s184 = int_to_ptr.hbm [resolvable:$true] %s183
          %s185 = sshll.u32 [#allocation5], 4
          %s186 = int_to_ptr.vmem [resolvable:$true] %s185
          %191 = dma.hbm_to_vmem [thread:$0]  %s184, 512, %s186, [#allocation6], 128, 128, 8
        $region16: #{tpu_custom_call.1} parent=11 // pred_fallthru
          _
        // Predicated region
        $region17: #{tpu_custom_call.1} parent=11 // pred_check
          %p192 = pneg %p90
        $region18: #{tpu_custom_call.1} parent=11 // pred_check_branch
          %194 = sbr.rel (%p192) target = $region20
        $region19: #{tpu_custom_call.1} parent=11 // pred_region
          %196 = vsyncadd [#allocation6], 0
          %s197 = sshll.u32 %s2, 4
          %s198 = int_to_ptr.hbm [resolvable:$true] %s197
          %s199 = sshll.u32 [#allocation7], 4
          %s200 = int_to_ptr.vmem [resolvable:$true] %s199
          %205 = dma.hbm_to_vmem [thread:$0]  %s198, 512, %s200, [#allocation6], 128, 128, 8
        $region20: #{tpu_custom_call.1} parent=11 // pred_fallthru
          _
        // Predicated region
        $region21: #{tpu_custom_call.1} parent=11 // pred_check
          %p206 = pneg %p111
        $region22: #{tpu_custom_call.1} parent=11 // pred_check_branch
          %208 = sbr.rel (%p206) target = $region24
        $region23: #{tpu_custom_call.1} parent=11 // pred_region
          _
        $region24: #{tpu_custom_call.1} parent=11 // pred_fallthru
          _
      $region12: #{tpu_custom_call.1} parent=5 // pred_fallthru
        _
      %p209 = scmp.lt.s32.totalorder %s22, 2
      // Predicated region
      $region25: #{tpu_custom_call.1} parent=5 // pred_check
        %p210 = pneg %p209
      $region26: #{tpu_custom_call.1} parent=5 // pred_check_branch
        %212 = sbr.rel (%p210) target = $region28
      $region27: #{tpu_custom_call.1} parent=5 // pred_region
        // Predicated region
        $region29: #{tpu_custom_call.1} parent=27 // pred_check
          %p213 = pneg %p42
        $region30: #{tpu_custom_call.1} parent=27 // pred_check_branch
          %215 = sbr.rel (%p213) target = $region32
        $region31: #{tpu_custom_call.1} parent=27 // pred_region
          %s216 = sand.u32 %s32, 1
          %s217 = scalar_lea.sflag [#allocation3], %s216
          %s218 = sand.u32 %s32, 1
          %s219 = smul.addr %s218, 16
          %s220 = scalar_lea.vmem [#allocation2], %s219
          %s221 = smul.u32 2, %s22
          %223 = vsyncadd %s217, 0
          %s224 = smul.addr %s221, 8
          %s225 = scalar_lea.hbm %s0, %s224
          %s226 = sshll.u32 %s225, 4
          %s227 = int_to_ptr.hbm [resolvable:$true] %s226
          %s228 = sshll.u32 %s220, 4
          %s229 = int_to_ptr.vmem [resolvable:$true] %s228
          %234 = dma.hbm_to_vmem [thread:$0]  %s227, 256, %s229, %s217, 128, 128, 8
        $region32: #{tpu_custom_call.1} parent=27 // pred_fallthru
          _
      $region28: #{tpu_custom_call.1} parent=5 // pred_fallthru
        _
      %p235 = scmp.le.s32.totalorder 1, %s22
      %p236 = scmp.lt.s32.totalorder %s22, 3
      %p237 = pnand %p235, %p236
      %p238 = pneg %p237
      // Predicated region
      $region33: #{tpu_custom_call.1} parent=5 // pred_check
        _
      $region34: #{tpu_custom_call.1} parent=5 // pred_check_branch
        %240 = sbr.rel (%p237) target = $region36
      $region35: #{tpu_custom_call.1} parent=5 // pred_region
        %s241 = ssub.s32 %s22, 1
        %s242 = sand.u32 %s35, 1
        %s243 = scalar_lea.sflag [#allocation3], %s242
        %s244 = sand.u32 %s35, 1
        %s245 = smul.addr %s244, 16
        %s246 = scalar_lea.vmem [#allocation2], %s245
        // Predicated region
        $region37: #{tpu_custom_call.1} parent=35 // pred_check
          %p247 = pneg %p48
        $region38: #{tpu_custom_call.1} parent=35 // pred_check_branch
          %249 = sbr.rel (%p247) target = $region40
        $region39: #{tpu_custom_call.1} parent=35 // pred_region
          %251 = dma.done %s243, 256
        $region40: #{tpu_custom_call.1} parent=35 // pred_fallthru
          _
        // Predicated region
        $region41: #{tpu_custom_call.1} parent=35 // pred_check
          %p252 = pneg %p69
        $region42: #{tpu_custom_call.1} parent=35 // pred_check_branch
          %254 = sbr.rel (%p252) target = $region44
        $region43: #{tpu_custom_call.1} parent=35 // pred_region
          %256 = dma.done [#allocation6], 512
        $region44: #{tpu_custom_call.1} parent=35 // pred_fallthru
          _
        // Predicated region
        $region45: #{tpu_custom_call.1} parent=35 // pred_check
          %p257 = pneg %p90
        $region46: #{tpu_custom_call.1} parent=35 // pred_check_branch
          %259 = sbr.rel (%p257) target = $region48
        $region47: #{tpu_custom_call.1} parent=35 // pred_region
          %261 = dma.done [#allocation6], 512
        $region48: #{tpu_custom_call.1} parent=35 // pred_fallthru
          _
        %s262 = sand.u32 %s35, 1
        %s263 = scalar_lea.sflag [#allocation3], %s262
        %s264 = sand.u32 %s35, 1
        %s265 = smul.addr %s264, 16
        %s266 = scalar_lea.vmem [#allocation2], %s265
        %p267 = pneg %p48
        %p268 = pneg %p45
        %p269 = pneg %p69
        %p270 = pneg %p66
        %p271 = pneg %p90
        %p272 = pneg %p87
        %p273 = pneg %p111
        %p274 = pneg %p108
        %p275 = pneg %p137
        %p276 = pneg %p134
        %s277 = sand.u32 %s124, 1
        %s278 = scalar_lea.sflag [#allocation4], %s277
        %s279 = sand.u32 %s124, 1
        %s280 = smul.addr %s279, 16
        %s281 = scalar_lea.vmem [#allocation8], %s280
        %p282 = pneg %p163
        %p283 = pneg %p160
        %s284 = sand.u32 %s150, 1
        %s285 = scalar_lea.sflag [#allocation10], %s284
        %s286 = sand.u32 %s150, 1
        %s287 = smul.addr %s286, 64
        %s288 = scalar_lea.vmem [#allocation9], %s287
        %s289 = smul.u32 2, %s27
        %s290 = smul.u32 2, %s27
        %s291 = smul.u32 2, %s27
        %v292 = vld [vmem:[%s246] sm:$0xff]
        %v293 = vld [vmem:[%s246 + $0x8] sm:$0xff]
        %v294 = vld [vmem:[#allocation5] sm:$0xff]
        %v295 = vld [vmem:[#allocation5 + $0x8] sm:$0xff]
        %v296 = vld [vmem:[#allocation5 + $0x10] sm:$0xff]
        %v297 = vld [vmem:[#allocation5 + $0x18] sm:$0xff]
        %vm298 = vcmask 261120
        %v300 = vsel %vm298, %v292, 0
        %v303 = vsel %vm298, %v293, 0
        %305 = vmatpush.msra.mxu0 0.0
        %306 = vmatpush.msra.mxu0 0.0
        %307 = vmatpush.msra.mxu0 0.0
        %308 = vmatpush.msra.mxu0 0.0
        %309 = vmatpush.msra.mxu0 0.0
        %310 = vmatpush.msra.mxu0 0.0
        %311 = vmatpush.msra.mxu0 0.0
        %312 = vmatpush.msra.mxu0 0.0
        %313 = vmatpush.msra.mxu0 0.0
        %314 = vmatpush.msra.mxu0 0.0
        %315 = vmatpush.msra.mxu0 0.0
        %316 = vmatpush.msra.mxu0 0.0
        %317 = vmatpush.msra.mxu0 %v297
        %318 = vmatpush.msra.mxu0 %v296
        %319 = vmatpush.msra.mxu0 %v295
        %320 = vmatpush.msra.mxu0 %v294
        %321 = vmatmul.f32.gmra.mxu0 %v300
        %v322 = vpop.f32.mrf.mxu0
        %v323 = vadd.f32 0.0, %v322
        %324 = vmatmul.f32.gmra.mxu0 %v303
        %v325 = vpop.f32.mrf.mxu0
        %v326 = vadd.f32 0.0, %v325
        %327 = vdwg.mxu0
        %330 = vrot.lane.b32.xlu0 %v323, 120
        %v331 = vpop.permute.xlu0 %330
        %332 = vrot.lane.b32.xlu0 %v326, 120
        %v333 = vpop.permute.xlu0 %332
        %336 = vrot.lane.b32.xlu0 %v323, 112
        %v337 = vpop.permute.xlu0 %336
        %338 = vrot.lane.b32.xlu0 %v326, 112
        %v339 = vpop.permute.xlu0 %338
        %342 = vrot.lane.b32.xlu0 %v323, 104
        %v343 = vpop.permute.xlu0 %342
        %344 = vrot.lane.b32.xlu0 %v326, 104
        %v345 = vpop.permute.xlu0 %344
        %v348 = vmul.f32 %v323, 0.35355338
        %v349 = vmul.f32 %v326, 0.35355338
        %v350 = vmul.f32 %v331, 0.35355338
        %v351 = vmul.f32 %v333, 0.35355338
        %v352 = vmul.f32 %v337, 0.35355338
        %v353 = vmul.f32 %v339, 0.35355338
        %v354 = vmul.f32 %v343, 0.35355338
        %v355 = vmul.f32 %v345, 0.35355338
        %356 = vrot.lane.b32.xlu0 %v323, 96
        %v357 = vpop.permute.xlu0 %356
        %vm358 = vcmask 64512
        %v360 = vsel %vm358, %v348, 0
        %v362 = vsel %vm358, %v357, 0
        %364 = vmatpush.xpose.msra.mxu0 0.0
        %365 = vmatpush.xpose.msra.mxu0 0.0
        %366 = vmatpush.xpose.msra.mxu0 0.0
        %367 = vmatpush.xpose.msra.mxu0 0.0
        %368 = vmatpush.xpose.msra.mxu0 0.0
        %369 = vmatpush.xpose.msra.mxu0 0.0
        %370 = vmatpush.xpose.msra.mxu0 0.0
        %371 = vmatpush.xpose.msra.mxu0 0.0
        %372 = vmatpush.xpose.msra.mxu0 0.0
        %373 = vmatpush.xpose.msra.mxu0 0.0
        %374 = vmatpush.xpose.msra.mxu0 0.0
        %375 = vmatpush.xpose.msra.mxu0 0.0
        %376 = vmatpush.xpose.msra.mxu0 0.0
        %377 = vmatpush.xpose.msra.mxu0 0.0
        %378 = vmatpush.xpose.msra.mxu0 0.0
        %379 = vmatpush.xpose.msra.mxu0 %v362
        %380 = vmatmul.f32.gmra.mxu0 %v360
        %v381 = vpop.f32.mrf.mxu0
        %v382 = vadd.f32 0.0, %v381
        %383 = vdwg.mxu0
        %384 = vrot.lane.b32.xlu0 %v326, 96
        %v385 = vpop.permute.xlu0 %384
        %v387 = vsel %vm358, %v349, 0
        %v389 = vsel %vm358, %v385, 0
        %391 = vmatpush.xpose.msra.mxu0 0.0
        %392 = vmatpush.xpose.msra.mxu0 0.0
        %393 = vmatpush.xpose.msra.mxu0 0.0
        %394 = vmatpush.xpose.msra.mxu0 0.0
        %395 = vmatpush.xpose.msra.mxu0 0.0
        %396 = vmatpush.xpose.msra.mxu0 0.0
        %397 = vmatpush.xpose.msra.mxu0 0.0
        %398 = vmatpush.xpose.msra.mxu0 0.0
        %399 = vmatpush.xpose.msra.mxu0 0.0
        %400 = vmatpush.xpose.msra.mxu0 0.0
        %401 = vmatpush.xpose.msra.mxu0 0.0
        %402 = vmatpush.xpose.msra.mxu0 0.0
        %403 = vmatpush.xpose.msra.mxu0 0.0
        %404 = vmatpush.xpose.msra.mxu0 0.0
        %405 = vmatpush.xpose.msra.mxu0 0.0
        %406 = vmatpush.xpose.msra.mxu0 %v389
        %407 = vmatmul.f32.gmra.mxu0 %v387
        %v408 = vpop.f32.mrf.mxu0
        %v409 = vadd.f32 0.0, %v408
        %410 = vdwg.mxu0
        %411 = vrot.lane.b32.xlu0 %v331, 96
        %v412 = vpop.permute.xlu0 %411
        %v414 = vsel %vm358, %v350, 0
        %v416 = vsel %vm358, %v412, 0
        %418 = vmatpush.xpose.msra.mxu0 0.0
        %419 = vmatpush.xpose.msra.mxu0 0.0
        %420 = vmatpush.xpose.msra.mxu0 0.0
        %421 = vmatpush.xpose.msra.mxu0 0.0
        %422 = vmatpush.xpose.msra.mxu0 0.0
        %423 = vmatpush.xpose.msra.mxu0 0.0
        %424 = vmatpush.xpose.msra.mxu0 0.0
        %425 = vmatpush.xpose.msra.mxu0 0.0
        %426 = vmatpush.xpose.msra.mxu0 0.0
        %427 = vmatpush.xpose.msra.mxu0 0.0
        %428 = vmatpush.xpose.msra.mxu0 0.0
        %429 = vmatpush.xpose.msra.mxu0 0.0
        %430 = vmatpush.xpose.msra.mxu0 0.0
        %431 = vmatpush.xpose.msra.mxu0 0.0
        %432 = vmatpush.xpose.msra.mxu0 0.0
        %433 = vmatpush.xpose.msra.mxu0 %v416
        %434 = vmatmul.f32.gmra.mxu0 %v414
        %v435 = vpop.f32.mrf.mxu0
        %v436 = vadd.f32 0.0, %v435
        %437 = vdwg.mxu0
        %438 = vrot.lane.b32.xlu0 %v333, 96
        %v439 = vpop.permute.xlu0 %438
        %v441 = vsel %vm358, %v351, 0
        %v443 = vsel %vm358, %v439, 0
        %445 = vmatpush.xpose.msra.mxu0 0.0
        %446 = vmatpush.xpose.msra.mxu0 0.0
        %447 = vmatpush.xpose.msra.mxu0 0.0
        %448 = vmatpush.xpose.msra.mxu0 0.0
        %449 = vmatpush.xpose.msra.mxu0 0.0
        %450 = vmatpush.xpose.msra.mxu0 0.0
        %451 = vmatpush.xpose.msra.mxu0 0.0
        %452 = vmatpush.xpose.msra.mxu0 0.0
        %453 = vmatpush.xpose.msra.mxu0 0.0
        %454 = vmatpush.xpose.msra.mxu0 0.0
        %455 = vmatpush.xpose.msra.mxu0 0.0
        %456 = vmatpush.xpose.msra.mxu0 0.0
        %457 = vmatpush.xpose.msra.mxu0 0.0
        %458 = vmatpush.xpose.msra.mxu0 0.0
        %459 = vmatpush.xpose.msra.mxu0 0.0
        %460 = vmatpush.xpose.msra.mxu0 %v443
        %461 = vmatmul.f32.gmra.mxu0 %v441
        %v462 = vpop.f32.mrf.mxu0
        %v463 = vadd.f32 0.0, %v462
        %464 = vdwg.mxu0
        %465 = vrot.lane.b32.xlu0 %v337, 96
        %v466 = vpop.permute.xlu0 %465
        %v468 = vsel %vm358, %v352, 0
        %v470 = vsel %vm358, %v466, 0
        %472 = vmatpush.xpose.msra.mxu0 0.0
        %473 = vmatpush.xpose.msra.mxu0 0.0
        %474 = vmatpush.xpose.msra.mxu0 0.0
        %475 = vmatpush.xpose.msra.mxu0 0.0
        %476 = vmatpush.xpose.msra.mxu0 0.0
        %477 = vmatpush.xpose.msra.mxu0 0.0
        %478 = vmatpush.xpose.msra.mxu0 0.0
        %479 = vmatpush.xpose.msra.mxu0 0.0
        %480 = vmatpush.xpose.msra.mxu0 0.0
        %481 = vmatpush.xpose.msra.mxu0 0.0
        %482 = vmatpush.xpose.msra.mxu0 0.0
        %483 = vmatpush.xpose.msra.mxu0 0.0
        %484 = vmatpush.xpose.msra.mxu0 0.0
        %485 = vmatpush.xpose.msra.mxu0 0.0
        %486 = vmatpush.xpose.msra.mxu0 0.0
        %487 = vmatpush.xpose.msra.mxu0 %v470
        %488 = vmatmul.f32.gmra.mxu0 %v468
        %v489 = vpop.f32.mrf.mxu0
        %v490 = vadd.f32 0.0, %v489
        %491 = vdwg.mxu0
        %492 = vrot.lane.b32.xlu0 %v339, 96
        %v493 = vpop.permute.xlu0 %492
        %v495 = vsel %vm358, %v353, 0
        %v497 = vsel %vm358, %v493, 0
        %499 = vmatpush.xpose.msra.mxu0 0.0
        %500 = vmatpush.xpose.msra.mxu0 0.0
        %501 = vmatpush.xpose.msra.mxu0 0.0
        %502 = vmatpush.xpose.msra.mxu0 0.0
        %503 = vmatpush.xpose.msra.mxu0 0.0
        %504 = vmatpush.xpose.msra.mxu0 0.0
        %505 = vmatpush.xpose.msra.mxu0 0.0
        %506 = vmatpush.xpose.msra.mxu0 0.0
        %507 = vmatpush.xpose.msra.mxu0 0.0
        %508 = vmatpush.xpose.msra.mxu0 0.0
        %509 = vmatpush.xpose.msra.mxu0 0.0
        %510 = vmatpush.xpose.msra.mxu0 0.0
        %511 = vmatpush.xpose.msra.mxu0 0.0
        %512 = vmatpush.xpose.msra.mxu0 0.0
        %513 = vmatpush.xpose.msra.mxu0 0.0
        %514 = vmatpush.xpose.msra.mxu0 %v497
        %515 = vmatmul.f32.gmra.mxu0 %v495
        %v516 = vpop.f32.mrf.mxu0
        %v517 = vadd.f32 0.0, %v516
        %518 = vdwg.mxu0
        %519 = vrot.lane.b32.xlu0 %v343, 96
        %v520 = vpop.permute.xlu0 %519
        %v522 = vsel %vm358, %v354, 0
        %v524 = vsel %vm358, %v520, 0
        %526 = vmatpush.xpose.msra.mxu0 0.0
        %527 = vmatpush.xpose.msra.mxu0 0.0
        %528 = vmatpush.xpose.msra.mxu0 0.0
        %529 = vmatpush.xpose.msra.mxu0 0.0
        %530 = vmatpush.xpose.msra.mxu0 0.0
        %531 = vmatpush.xpose.msra.mxu0 0.0
        %532 = vmatpush.xpose.msra.mxu0 0.0
        %533 = vmatpush.xpose.msra.mxu0 0.0
        %534 = vmatpush.xpose.msra.mxu0 0.0
        %535 = vmatpush.xpose.msra.mxu0 0.0
        %536 = vmatpush.xpose.msra.mxu0 0.0
        %537 = vmatpush.xpose.msra.mxu0 0.0
        %538 = vmatpush.xpose.msra.mxu0 0.0
        %539 = vmatpush.xpose.msra.mxu0 0.0
        %540 = vmatpush.xpose.msra.mxu0 0.0
        %541 = vmatpush.xpose.msra.mxu0 %v524
        %542 = vmatmul.f32.gmra.mxu0 %v522
        %v543 = vpop.f32.mrf.mxu0
        %v544 = vadd.f32 0.0, %v543
        %545 = vdwg.mxu0
        %546 = vrot.lane.b32.xlu0 %v345, 96
        %v547 = vpop.permute.xlu0 %546
        %v549 = vsel %vm358, %v355, 0
        %v551 = vsel %vm358, %v547, 0
        %553 = vmatpush.xpose.msra.mxu0 0.0
        %554 = vmatpush.xpose.msra.mxu0 0.0
        %555 = vmatpush.xpose.msra.mxu0 0.0
        %556 = vmatpush.xpose.msra.mxu0 0.0
        %557 = vmatpush.xpose.msra.mxu0 0.0
        %558 = vmatpush.xpose.msra.mxu0 0.0
        %559 = vmatpush.xpose.msra.mxu0 0.0
        %560 = vmatpush.xpose.msra.mxu0 0.0
        %561 = vmatpush.xpose.msra.mxu0 0.0
        %562 = vmatpush.xpose.msra.mxu0 0.0
        %563 = vmatpush.xpose.msra.mxu0 0.0
        %564 = vmatpush.xpose.msra.mxu0 0.0
        %565 = vmatpush.xpose.msra.mxu0 0.0
        %566 = vmatpush.xpose.msra.mxu0 0.0
        %567 = vmatpush.xpose.msra.mxu0 0.0
        %568 = vmatpush.xpose.msra.mxu0 %v551
        %569 = vmatmul.f32.gmra.mxu0 %v549
        %v570 = vpop.f32.mrf.mxu0
        %v571 = vadd.f32 0.0, %v570
        %572 = vdwg.mxu0
        %v573 = vsel %vm358, %v382, -inf
        %574 = vmax.xlane.f32.xlu0 %v573
        %v575 = vpop.xlane.xlu0 %574
        %v576 = vsel %vm358, %v409, -inf
        %577 = vmax.xlane.f32.xlu0 %v576
        %v578 = vpop.xlane.xlu0 %577
        %v579 = vsel %vm358, %v436, -inf
        %580 = vmax.xlane.f32.xlu0 %v579
        %v581 = vpop.xlane.xlu0 %580
        %v582 = vsel %vm358, %v463, -inf
        %583 = vmax.xlane.f32.xlu0 %v582
        %v584 = vpop.xlane.xlu0 %583
        %v585 = vsel %vm358, %v490, -inf
        %586 = vmax.xlane.f32.xlu0 %v585
        %v587 = vpop.xlane.xlu0 %586
        %v588 = vsel %vm358, %v517, -inf
        %589 = vmax.xlane.f32.xlu0 %v588
        %v590 = vpop.xlane.xlu0 %589
        %v591 = vsel %vm358, %v544, -inf
        %592 = vmax.xlane.f32.xlu0 %v591
        %v593 = vpop.xlane.xlu0 %592
        %v594 = vsel %vm358, %v571, -inf
        %595 = vmax.xlane.f32.xlu0 %v594
        %v596 = vpop.xlane.xlu0 %595
        %v597 = vsub.f32 %v382, %v575
        %v598 = vsub.f32 %v409, %v578
        %v599 = vsub.f32 %v436, %v581
        %v600 = vsub.f32 %v463, %v584
        %v601 = vsub.f32 %v490, %v587
        %v602 = vsub.f32 %v517, %v590
        %v603 = vsub.f32 %v544, %v593
        %v604 = vsub.f32 %v571, %v596
        %v605 = vmul.f32 %v597, 1.442695
        %v606 = vpow.pop %v605
        %v607 = vmul.f32 %v598, 1.442695
        %v608 = vpow.pop %v607
        %v609 = vmul.f32 %v599, 1.442695
        %v610 = vpow.pop %v609
        %v611 = vmul.f32 %v600, 1.442695
        %v612 = vpow.pop %v611
        %v613 = vmul.f32 %v601, 1.442695
        %v614 = vpow.pop %v613
        %v615 = vmul.f32 %v602, 1.442695
        %v616 = vpow.pop %v615
        %v617 = vmul.f32 %v603, 1.442695
        %v618 = vpow.pop %v617
        %v619 = vmul.f32 %v604, 1.442695
        %v620 = vpow.pop %v619
        %v621 = vsel %vm358, %v606, 0.0
        %622 = vadd.xlane.f32.xlu0 %v621
        %v623 = vpop.xlane.xlu0 %622
        %v624 = vsel %vm358, %v608, 0.0
        %625 = vadd.xlane.f32.xlu0 %v624
        %v626 = vpop.xlane.xlu0 %625
        %v627 = vsel %vm358, %v610, 0.0
        %628 = vadd.xlane.f32.xlu0 %v627
        %v629 = vpop.xlane.xlu0 %628
        %v630 = vsel %vm358, %v612, 0.0
        %631 = vadd.xlane.f32.xlu0 %v630
        %v632 = vpop.xlane.xlu0 %631
        %v633 = vsel %vm358, %v614, 0.0
        %634 = vadd.xlane.f32.xlu0 %v633
        %v635 = vpop.xlane.xlu0 %634
        %v636 = vsel %vm358, %v616, 0.0
        %637 = vadd.xlane.f32.xlu0 %v636
        %v638 = vpop.xlane.xlu0 %637
        %v639 = vsel %vm358, %v618, 0.0
        %640 = vadd.xlane.f32.xlu0 %v639
        %v641 = vpop.xlane.xlu0 %640
        %v642 = vsel %vm358, %v620, 0.0
        %643 = vadd.xlane.f32.xlu0 %v642
        %v644 = vpop.xlane.xlu0 %643
        %v645 = vrcp.pop %v623
        %v646 = vmul.f32 %v623, %v645
        %v647 = vsub.f32 1.0, %v646
        %v648 = vmul.f32 %v645, %v647
        %v649 = vadd.f32 %v645, %v648
        %vm650 = vweird.f32 %v623
        %vm651 = vweird.f32 %v645
        %vm652 = vmor %vm650, %vm651
        %v653 = vsel %vm652, %v645, %v649
        %v654 = vand.u32 2147483647, %v623
        %vm655 = vcmp.eq.f32.partialorder %v654, 8.507059e+37
        %v656 = vand.u32 %v623, 2147483648
        %v657 = vor.u32 1.1754944e-38, %v656
        %v658 = vsel %vm655, %v657, %v653
        %v659 = vmul.f32 1.0, %v658
        %v660 = vrcp.pop %v626
        %v661 = vmul.f32 %v626, %v660
        %v662 = vsub.f32 1.0, %v661
        %v663 = vmul.f32 %v660, %v662
        %v664 = vadd.f32 %v660, %v663
        %vm665 = vweird.f32 %v626
        %vm666 = vweird.f32 %v660
        %vm667 = vmor %vm665, %vm666
        %v668 = vsel %vm667, %v660, %v664
        %v669 = vand.u32 2147483647, %v626
        %vm670 = vcmp.eq.f32.partialorder %v669, 8.507059e+37
        %v671 = vand.u32 %v626, 2147483648
        %v672 = vor.u32 1.1754944e-38, %v671
        %v673 = vsel %vm670, %v672, %v668
        %v674 = vmul.f32 1.0, %v673
        %v675 = vrcp.pop %v629
        %v676 = vmul.f32 %v629, %v675
        %v677 = vsub.f32 1.0, %v676
        %v678 = vmul.f32 %v675, %v677
        %v679 = vadd.f32 %v675, %v678
        %vm680 = vweird.f32 %v629
        %vm681 = vweird.f32 %v675
        %vm682 = vmor %vm680, %vm681
        %v683 = vsel %vm682, %v675, %v679
        %v684 = vand.u32 2147483647, %v629
        %vm685 = vcmp.eq.f32.partialorder %v684, 8.507059e+37
        %v686 = vand.u32 %v629, 2147483648
        %v687 = vor.u32 1.1754944e-38, %v686
        %v688 = vsel %vm685, %v687, %v683
        %v689 = vmul.f32 1.0, %v688
        %v690 = vrcp.pop %v632
        %v691 = vmul.f32 %v632, %v690
        %v692 = vsub.f32 1.0, %v691
        %v693 = vmul.f32 %v690, %v692
        %v694 = vadd.f32 %v690, %v693
        %vm695 = vweird.f32 %v632
        %vm696 = vweird.f32 %v690
        %vm697 = vmor %vm695, %vm696
        %v698 = vsel %vm697, %v690, %v694
        %v699 = vand.u32 2147483647, %v632
        %vm700 = vcmp.eq.f32.partialorder %v699, 8.507059e+37
        %v701 = vand.u32 %v632, 2147483648
        %v702 = vor.u32 1.1754944e-38, %v701
        %v703 = vsel %vm700, %v702, %v698
        %v704 = vmul.f32 1.0, %v703
        %v705 = vrcp.pop %v635
        %v706 = vmul.f32 %v635, %v705
        %v707 = vsub.f32 1.0, %v706
        %v708 = vmul.f32 %v705, %v707
        %v709 = vadd.f32 %v705, %v708
        %vm710 = vweird.f32 %v635
        %vm711 = vweird.f32 %v705
        %vm712 = vmor %vm710, %vm711
        %v713 = vsel %vm712, %v705, %v709
        %v714 = vand.u32 2147483647, %v635
        %vm715 = vcmp.eq.f32.partialorder %v714, 8.507059e+37
        %v716 = vand.u32 %v635, 2147483648
        %v717 = vor.u32 1.1754944e-38, %v716
        %v718 = vsel %vm715, %v717, %v713
        %v719 = vmul.f32 1.0, %v718
        %v720 = vrcp.pop %v638
        %v721 = vmul.f32 %v638, %v720
        %v722 = vsub.f32 1.0, %v721
        %v723 = vmul.f32 %v720, %v722
        %v724 = vadd.f32 %v720, %v723
        %vm725 = vweird.f32 %v638
        %vm726 = vweird.f32 %v720
        %vm727 = vmor %vm725, %vm726
        %v728 = vsel %vm727, %v720, %v724
        %v729 = vand.u32 2147483647, %v638
        %vm730 = vcmp.eq.f32.partialorder %v729, 8.507059e+37
        %v731 = vand.u32 %v638, 2147483648
        %v732 = vor.u32 1.1754944e-38, %v731
        %v733 = vsel %vm730, %v732, %v728
        %v734 = vmul.f32 1.0, %v733
        %v735 = vrcp.pop %v641
        %v736 = vmul.f32 %v641, %v735
        %v737 = vsub.f32 1.0, %v736
        %v738 = vmul.f32 %v735, %v737
        %v739 = vadd.f32 %v735, %v738
        %vm740 = vweird.f32 %v641
        %vm741 = vweird.f32 %v735
        %vm742 = vmor %vm740, %vm741
        %v743 = vsel %vm742, %v735, %v739
        %v744 = vand.u32 2147483647, %v641
        %vm745 = vcmp.eq.f32.partialorder %v744, 8.507059e+37
        %v746 = vand.u32 %v641, 2147483648
        %v747 = vor.u32 1.1754944e-38, %v746
        %v748 = vsel %vm745, %v747, %v743
        %v749 = vmul.f32 1.0, %v748
        %v750 = vrcp.pop %v644
        %v751 = vmul.f32 %v644, %v750
        %v752 = vsub.f32 1.0, %v751
        %v753 = vmul.f32 %v750, %v752
        %v754 = vadd.f32 %v750, %v753
        %vm755 = vweird.f32 %v644
        %vm756 = vweird.f32 %v750
        %vm757 = vmor %vm755, %vm756
        %v758 = vsel %vm757, %v750, %v754
        %v759 = vand.u32 2147483647, %v644
        %vm760 = vcmp.eq.f32.partialorder %v759, 8.507059e+37
        %v761 = vand.u32 %v644, 2147483648
        %v762 = vor.u32 1.1754944e-38, %v761
        %v763 = vsel %vm760, %v762, %v758
        %v764 = vmul.f32 1.0, %v763
        %v765 = vmul.f32 %v606, %v659
        %v766 = vmul.f32 %v608, %v674
        %v767 = vmul.f32 %v610, %v689
        %v768 = vmul.f32 %v612, %v704
        %v769 = vmul.f32 %v614, %v719
        %v770 = vmul.f32 %v616, %v734
        %v771 = vmul.f32 %v618, %v749
        %v772 = vmul.f32 %v620, %v764
        %773 = vst.msk [vmem:[%s288] sm:$0xff] %vm358, %v765
        %774 = vst.msk [vmem:[%s288 + $0x8] sm:$0xff] %vm358, %v766
        %775 = vst.msk [vmem:[%s288 + $0x10] sm:$0xff] %vm358, %v767
        %776 = vst.msk [vmem:[%s288 + $0x18] sm:$0xff] %vm358, %v768
        %777 = vst.msk [vmem:[%s288 + $0x20] sm:$0xff] %vm358, %v769
        %778 = vst.msk [vmem:[%s288 + $0x28] sm:$0xff] %vm358, %v770
        %779 = vst.msk [vmem:[%s288 + $0x30] sm:$0xff] %vm358, %v771
        %780 = vst.msk [vmem:[%s288 + $0x38] sm:$0xff] %vm358, %v772
        %781 = vrot.lane.b32.xlu0 %v323, 64
        %v782 = vpop.permute.xlu0 %781
        %v785 = vsel %vm358, %v765, 0
        %787 = vmatpush.msra.mxu0 0.0
        %788 = vmatpush.msra.mxu0 0.0
        %789 = vmatpush.msra.mxu0 0.0
        %790 = vmatpush.msra.mxu0 0.0
        %791 = vmatpush.msra.mxu0 0.0
        %792 = vmatpush.msra.mxu0 0.0
        %793 = vmatpush.msra.mxu0 0.0
        %794 = vmatpush.msra.mxu0 0.0
        %795 = vmatpush.msra.mxu0 0.0
        %796 = vmatpush.msra.mxu0 0.0
        %797 = vmatpush.msra.mxu0 0.0
        %798 = vmatpush.msra.mxu0 0.0
        %799 = vmatpush.msra.mxu0 0.0
        %800 = vmatpush.msra.mxu0 0.0
        %801 = vmatpush.msra.mxu0 0.0
        %802 = vmatpush.msra.mxu0 %v782
        %803 = vmatmul.f32.gmra.mxu0 %v785
        %v804 = vpop.f32.mrf.mxu0
        %v805 = vadd.f32 0.0, %v804
        %806 = vdwg.mxu0
        %807 = vrot.lane.b32.xlu0 %v326, 64
        %v808 = vpop.permute.xlu0 %807
        %v811 = vsel %vm358, %v766, 0
        %813 = vmatpush.msra.mxu0 0.0
        %814 = vmatpush.msra.mxu0 0.0
        %815 = vmatpush.msra.mxu0 0.0
        %816 = vmatpush.msra.mxu0 0.0
        %817 = vmatpush.msra.mxu0 0.0
        %818 = vmatpush.msra.mxu0 0.0
        %819 = vmatpush.msra.mxu0 0.0
        %820 = vmatpush.msra.mxu0 0.0
        %821 = vmatpush.msra.mxu0 0.0
        %822 = vmatpush.msra.mxu0 0.0
        %823 = vmatpush.msra.mxu0 0.0
        %824 = vmatpush.msra.mxu0 0.0
        %825 = vmatpush.msra.mxu0 0.0
        %826 = vmatpush.msra.mxu0 0.0
        %827 = vmatpush.msra.mxu0 0.0
        %828 = vmatpush.msra.mxu0 %v808
        %829 = vmatmul.f32.gmra.mxu0 %v811
        %v830 = vpop.f32.mrf.mxu0
        %v831 = vadd.f32 0.0, %v830
        %832 = vdwg.mxu0
        %833 = vrot.lane.b32.xlu0 %v331, 64
        %v834 = vpop.permute.xlu0 %833
        %v837 = vsel %vm358, %v767, 0
        %839 = vmatpush.msra.mxu0 0.0
        %840 = vmatpush.msra.mxu0 0.0
        %841 = vmatpush.msra.mxu0 0.0
        %842 = vmatpush.msra.mxu0 0.0
        %843 = vmatpush.msra.mxu0 0.0
        %844 = vmatpush.msra.mxu0 0.0
        %845 = vmatpush.msra.mxu0 0.0
        %846 = vmatpush.msra.mxu0 0.0
        %847 = vmatpush.msra.mxu0 0.0
        %848 = vmatpush.msra.mxu0 0.0
        %849 = vmatpush.msra.mxu0 0.0
        %850 = vmatpush.msra.mxu0 0.0
        %851 = vmatpush.msra.mxu0 0.0
        %852 = vmatpush.msra.mxu0 0.0
        %853 = vmatpush.msra.mxu0 0.0
        %854 = vmatpush.msra.mxu0 %v834
        %855 = vmatmul.f32.gmra.mxu0 %v837
        %v856 = vpop.f32.mrf.mxu0
        %v857 = vadd.f32 0.0, %v856
        %858 = vdwg.mxu0
        %859 = vrot.lane.b32.xlu0 %v333, 64
        %v860 = vpop.permute.xlu0 %859
        %v863 = vsel %vm358, %v768, 0
        %865 = vmatpush.msra.mxu0 0.0
        %866 = vmatpush.msra.mxu0 0.0
        %867 = vmatpush.msra.mxu0 0.0
        %868 = vmatpush.msra.mxu0 0.0
        %869 = vmatpush.msra.mxu0 0.0
        %870 = vmatpush.msra.mxu0 0.0
        %871 = vmatpush.msra.mxu0 0.0
        %872 = vmatpush.msra.mxu0 0.0
        %873 = vmatpush.msra.mxu0 0.0
        %874 = vmatpush.msra.mxu0 0.0
        %875 = vmatpush.msra.mxu0 0.0
        %876 = vmatpush.msra.mxu0 0.0
        %877 = vmatpush.msra.mxu0 0.0
        %878 = vmatpush.msra.mxu0 0.0
        %879 = vmatpush.msra.mxu0 0.0
        %880 = vmatpush.msra.mxu0 %v860
        %881 = vmatmul.f32.gmra.mxu0 %v863
        %v882 = vpop.f32.mrf.mxu0
        %v883 = vadd.f32 0.0, %v882
        %884 = vdwg.mxu0
        %885 = vrot.lane.b32.xlu0 %v337, 64
        %v886 = vpop.permute.xlu0 %885
        %v889 = vsel %vm358, %v769, 0
        %891 = vmatpush.msra.mxu0 0.0
        %892 = vmatpush.msra.mxu0 0.0
        %893 = vmatpush.msra.mxu0 0.0
        %894 = vmatpush.msra.mxu0 0.0
        %895 = vmatpush.msra.mxu0 0.0
        %896 = vmatpush.msra.mxu0 0.0
        %897 = vmatpush.msra.mxu0 0.0
        %898 = vmatpush.msra.mxu0 0.0
        %899 = vmatpush.msra.mxu0 0.0
        %900 = vmatpush.msra.mxu0 0.0
        %901 = vmatpush.msra.mxu0 0.0
        %902 = vmatpush.msra.mxu0 0.0
        %903 = vmatpush.msra.mxu0 0.0
        %904 = vmatpush.msra.mxu0 0.0
        %905 = vmatpush.msra.mxu0 0.0
        %906 = vmatpush.msra.mxu0 %v886
        %907 = vmatmul.f32.gmra.mxu0 %v889
        %v908 = vpop.f32.mrf.mxu0
        %v909 = vadd.f32 0.0, %v908
        %910 = vdwg.mxu0
        %911 = vrot.lane.b32.xlu0 %v339, 64
        %v912 = vpop.permute.xlu0 %911
        %v915 = vsel %vm358, %v770, 0
        %917 = vmatpush.msra.mxu0 0.0
        %918 = vmatpush.msra.mxu0 0.0
        %919 = vmatpush.msra.mxu0 0.0
        %920 = vmatpush.msra.mxu0 0.0
        %921 = vmatpush.msra.mxu0 0.0
        %922 = vmatpush.msra.mxu0 0.0
        %923 = vmatpush.msra.mxu0 0.0
        %924 = vmatpush.msra.mxu0 0.0
        %925 = vmatpush.msra.mxu0 0.0
        %926 = vmatpush.msra.mxu0 0.0
        %927 = vmatpush.msra.mxu0 0.0
        %928 = vmatpush.msra.mxu0 0.0
        %929 = vmatpush.msra.mxu0 0.0
        %930 = vmatpush.msra.mxu0 0.0
        %931 = vmatpush.msra.mxu0 0.0
        %932 = vmatpush.msra.mxu0 %v912
        %933 = vmatmul.f32.gmra.mxu0 %v915
        %v934 = vpop.f32.mrf.mxu0
        %v935 = vadd.f32 0.0, %v934
        %936 = vdwg.mxu0
        %937 = vrot.lane.b32.xlu0 %v343, 64
        %v938 = vpop.permute.xlu0 %937
        %v941 = vsel %vm358, %v771, 0
        %943 = vmatpush.msra.mxu0 0.0
        %944 = vmatpush.msra.mxu0 0.0
        %945 = vmatpush.msra.mxu0 0.0
        %946 = vmatpush.msra.mxu0 0.0
        %947 = vmatpush.msra.mxu0 0.0
        %948 = vmatpush.msra.mxu0 0.0
        %949 = vmatpush.msra.mxu0 0.0
        %950 = vmatpush.msra.mxu0 0.0
        %951 = vmatpush.msra.mxu0 0.0
        %952 = vmatpush.msra.mxu0 0.0
        %953 = vmatpush.msra.mxu0 0.0
        %954 = vmatpush.msra.mxu0 0.0
        %955 = vmatpush.msra.mxu0 0.0
        %956 = vmatpush.msra.mxu0 0.0
        %957 = vmatpush.msra.mxu0 0.0
        %958 = vmatpush.msra.mxu0 %v938
        %959 = vmatmul.f32.gmra.mxu0 %v941
        %v960 = vpop.f32.mrf.mxu0
        %v961 = vadd.f32 0.0, %v960
        %962 = vdwg.mxu0
        %963 = vrot.lane.b32.xlu0 %v345, 64
        %v964 = vpop.permute.xlu0 %963
        %v967 = vsel %vm358, %v772, 0
        %969 = vmatpush.msra.mxu0 0.0
        %970 = vmatpush.msra.mxu0 0.0
        %971 = vmatpush.msra.mxu0 0.0
        %972 = vmatpush.msra.mxu0 0.0
        %973 = vmatpush.msra.mxu0 0.0
        %974 = vmatpush.msra.mxu0 0.0
        %975 = vmatpush.msra.mxu0 0.0
        %976 = vmatpush.msra.mxu0 0.0
        %977 = vmatpush.msra.mxu0 0.0
        %978 = vmatpush.msra.mxu0 0.0
        %979 = vmatpush.msra.mxu0 0.0
        %980 = vmatpush.msra.mxu0 0.0
        %981 = vmatpush.msra.mxu0 0.0
        %982 = vmatpush.msra.mxu0 0.0
        %983 = vmatpush.msra.mxu0 0.0
        %984 = vmatpush.msra.mxu0 %v964
        %985 = vmatmul.f32.gmra.mxu0 %v967
        %v986 = vpop.f32.mrf.mxu0
        %v987 = vadd.f32 0.0, %v986
        %988 = vdwg.mxu0
        %v989 = vld [vmem:[#allocation7] sm:$0xff]
        %v990 = vld [vmem:[#allocation7 + $0x8] sm:$0xff]
        %v991 = vld [vmem:[#allocation7 + $0x10] sm:$0xff]
        %v992 = vld [vmem:[#allocation7 + $0x18] sm:$0xff]
        %v994 = vsel %vm358, %v805, 0
        %v997 = vsel %vm358, %v831, 0
        %999 = vmatpush.msra.mxu0 0.0
        %1000 = vmatpush.msra.mxu0 0.0
        %1001 = vmatpush.msra.mxu0 0.0
        %1002 = vmatpush.msra.mxu0 0.0
        %1003 = vmatpush.msra.mxu0 0.0
        %1004 = vmatpush.msra.mxu0 0.0
        %1005 = vmatpush.msra.mxu0 0.0
        %1006 = vmatpush.msra.mxu0 0.0
        %1007 = vmatpush.msra.mxu0 0.0
        %1008 = vmatpush.msra.mxu0 0.0
        %1009 = vmatpush.msra.mxu0 0.0
        %1010 = vmatpush.msra.mxu0 0.0
        %1011 = vmatpush.msra.mxu0 0.0
        %1012 = vmatpush.msra.mxu0 0.0
        %1013 = vmatpush.msra.mxu0 0.0
        %1014 = vmatpush.msra.mxu0 %v989
        %1015 = vmatmul.f32.gmra.mxu0 %v994
        %v1016 = vpop.f32.mrf.mxu0
        %v1017 = vadd.f32 0.0, %v1016
        %1018 = vmatmul.f32.gmra.mxu0 %v997
        %v1019 = vpop.f32.mrf.mxu0
        %v1020 = vadd.f32 0.0, %v1019
        %1021 = vdwg.mxu0
        %v1023 = vsel %vm358, %v857, 0
        %v1026 = vsel %vm358, %v883, 0
        %1028 = vmatpush.msra.mxu0 0.0
        %1029 = vmatpush.msra.mxu0 0.0
        %1030 = vmatpush.msra.mxu0 0.0
        %1031 = vmatpush.msra.mxu0 0.0
        %1032 = vmatpush.msra.mxu0 0.0
        %1033 = vmatpush.msra.mxu0 0.0
        %1034 = vmatpush.msra.mxu0 0.0
        %1035 = vmatpush.msra.mxu0 0.0
        %1036 = vmatpush.msra.mxu0 0.0
        %1037 = vmatpush.msra.mxu0 0.0
        %1038 = vmatpush.msra.mxu0 0.0
        %1039 = vmatpush.msra.mxu0 0.0
        %1040 = vmatpush.msra.mxu0 0.0
        %1041 = vmatpush.msra.mxu0 0.0
        %1042 = vmatpush.msra.mxu0 0.0
        %1043 = vmatpush.msra.mxu0 %v990
        %1044 = vmatmul.f32.gmra.mxu0 %v1023
        %v1045 = vpop.f32.mrf.mxu0
        %v1046 = vadd.f32 0.0, %v1045
        %1047 = vmatmul.f32.gmra.mxu0 %v1026
        %v1048 = vpop.f32.mrf.mxu0
        %v1049 = vadd.f32 0.0, %v1048
        %1050 = vdwg.mxu0
        %v1052 = vsel %vm358, %v909, 0
        %v1055 = vsel %vm358, %v935, 0
        %1057 = vmatpush.msra.mxu0 0.0
        %1058 = vmatpush.msra.mxu0 0.0
        %1059 = vmatpush.msra.mxu0 0.0
        %1060 = vmatpush.msra.mxu0 0.0
        %1061 = vmatpush.msra.mxu0 0.0
        %1062 = vmatpush.msra.mxu0 0.0
        %1063 = vmatpush.msra.mxu0 0.0
        %1064 = vmatpush.msra.mxu0 0.0
        %1065 = vmatpush.msra.mxu0 0.0
        %1066 = vmatpush.msra.mxu0 0.0
        %1067 = vmatpush.msra.mxu0 0.0
        %1068 = vmatpush.msra.mxu0 0.0
        %1069 = vmatpush.msra.mxu0 0.0
        %1070 = vmatpush.msra.mxu0 0.0
        %1071 = vmatpush.msra.mxu0 0.0
        %1072 = vmatpush.msra.mxu0 %v991
        %1073 = vmatmul.f32.gmra.mxu0 %v1052
        %v1074 = vpop.f32.mrf.mxu0
        %v1075 = vadd.f32 0.0, %v1074
        %1076 = vmatmul.f32.gmra.mxu0 %v1055
        %v1077 = vpop.f32.mrf.mxu0
        %v1078 = vadd.f32 0.0, %v1077
        %1079 = vdwg.mxu0
        %v1081 = vsel %vm358, %v961, 0
        %v1084 = vsel %vm358, %v987, 0
        %1086 = vmatpush.msra.mxu0 0.0
        %1087 = vmatpush.msra.mxu0 0.0
        %1088 = vmatpush.msra.mxu0 0.0
        %1089 = vmatpush.msra.mxu0 0.0
        %1090 = vmatpush.msra.mxu0 0.0
        %1091 = vmatpush.msra.mxu0 0.0
        %1092 = vmatpush.msra.mxu0 0.0
        %1093 = vmatpush.msra.mxu0 0.0
        %1094 = vmatpush.msra.mxu0 0.0
        %1095 = vmatpush.msra.mxu0 0.0
        %1096 = vmatpush.msra.mxu0 0.0
        %1097 = vmatpush.msra.mxu0 0.0
        %1098 = vmatpush.msra.mxu0 0.0
        %1099 = vmatpush.msra.mxu0 0.0
        %1100 = vmatpush.msra.mxu0 0.0
        %1101 = vmatpush.msra.mxu0 %v992
        %1102 = vmatmul.f32.gmra.mxu0 %v1081
        %v1103 = vpop.f32.mrf.mxu0
        %v1104 = vadd.f32 0.0, %v1103
        %1105 = vmatmul.f32.gmra.mxu0 %v1084
        %v1106 = vpop.f32.mrf.mxu0
        %v1107 = vadd.f32 0.0, %v1106
        %1108 = vdwg.mxu0
        %v1109 = vsel %vm298, %v1017, 0.0
        %v1110 = vsel %vm298, %v1046, 0.0
        %v1111 = vadd.f32 %v1109, %v1110
        %v1112 = vsel %vm298, %v1075, 0.0
        %v1113 = vadd.f32 %v1111, %v1112
        %v1114 = vsel %vm298, %v1104, 0.0
        %v1115 = vadd.f32 %v1113, %v1114
        %v1116 = vsel %vm298, %v1020, 0.0
        %v1117 = vsel %vm298, %v1049, 0.0
        %v1118 = vadd.f32 %v1116, %v1117
        %v1119 = vsel %vm298, %v1078, 0.0
        %v1120 = vadd.f32 %v1118, %v1119
        %v1121 = vsel %vm298, %v1107, 0.0
        %v1122 = vadd.f32 %v1120, %v1121
        %v1123 = vld [vmem:[%s3] sm:$0x1]
        %v1125 = vperm.slane %v1123, 0
        %v1127 = vadd.f32 %v1115, %v1125
        %v1128 = vadd.f32 %v1122, %v1125
        %1129 = vst.msk [vmem:[%s281] sm:$0xff] %vm298, %v1127
        %1130 = vst.msk [vmem:[%s281 + $0x8] sm:$0xff] %vm298, %v1128
        %s1131 = sand.u32 %s124, 1
        %s1132 = scalar_lea.sflag [#allocation4], %s1131
        %s1133 = sand.u32 %s124, 1
        %s1134 = smul.addr %s1133, 16
        %s1135 = scalar_lea.vmem [#allocation8], %s1134
        %s1136 = sand.u32 %s150, 1
        %s1137 = scalar_lea.sflag [#allocation10], %s1136
        %s1138 = sand.u32 %s150, 1
        %s1139 = smul.addr %s1138, 64
        %s1140 = scalar_lea.vmem [#allocation9], %s1139
        // Predicated region
        $region49: #{tpu_custom_call.1} parent=35 // pred_check
          %p1141 = pneg %p134
        $region50: #{tpu_custom_call.1} parent=35 // pred_check_branch
          %1143 = sbr.rel (%p1141) target = $region52
        $region51: #{tpu_custom_call.1} parent=35 // pred_region
          %s1144 = smul.u32 2, %s27
          %1146 = vsyncadd %s1132, 0
          %s1147 = smul.addr %s1144, 8
          %s1148 = scalar_lea.hbm %s4, %s1147
          %s1149 = sshll.u32 %s1135, 4
          %s1150 = int_to_ptr.vmem [resolvable:$true] %s1149
          %s1151 = sshll.u32 %s1148, 4
          %s1152 = int_to_ptr.hbm [resolvable:$true] %s1151
          %1157 = dma.vmem_to_hbm [thread:$0]  %s1150, 256, %s1152, %s1132, 128, 128, 8
        $region52: #{tpu_custom_call.1} parent=35 // pred_fallthru
          _
        // Predicated region
        $region53: #{tpu_custom_call.1} parent=35 // pred_check
          %p1158 = pneg %p160
        $region54: #{tpu_custom_call.1} parent=35 // pred_check_branch
          %1160 = sbr.rel (%p1158) target = $region56
        $region55: #{tpu_custom_call.1} parent=35 // pred_region
          #allocation12 [shape = 'u32[6]{0}', space=smem, size = 0x18, scoped, tag = 'DMA stride descriptor']
          %s1161 = smul.u32 2, %s27
          %1163 = vsyncadd %s1137, 0
          %s1164 = smul.addr %s1161, 8
          %s1165 = scalar_lea.hbm %s5, %s1164
          %s1167 = sshll.u32 1, 14
          %s1168 = sxor.u32 4294967295, %s1167
          %s1171 = sshll.u32 7, 18
          %s1172 = sxor.u32 4294967295, %s1171
          %s1173 = sand.u32 0, %s1172
          %s1175 = sor.u32 %s1173, 0
          %s1176 = sshll.u32 %s1140, 4
          %s1177 = int_to_ptr.vmem [resolvable:$true] %s1176
          %s1178 = sshll.u32 %s1165, 4
          %s1179 = int_to_ptr.hbm [resolvable:$true] %s1178
          %1185 = sst [smem:[#allocation12]] 256
          %s1186 = scalar_lea.smem [#allocation12], 1
          %1187 = sst [smem:[%s1186]] 512
          %s1188 = scalar_lea.smem [#allocation12], 2
          %1189 = sst [smem:[%s1188]] 2
          %s1190 = scalar_lea.smem [#allocation12], 3
          %1191 = sst [smem:[%s1190]] 128
          %s1192 = scalar_lea.smem [#allocation12], 4
          %1193 = sst [smem:[%s1192]] 128
          %s1194 = scalar_lea.smem [#allocation12], 5
          %1195 = sst [smem:[%s1194]] 8
          %1197 = dma.general %s1177, 1024, %s1179, %s1137, [#allocation11], [#allocation12], %s1175, 0
        $region56: #{tpu_custom_call.1} parent=35 // pred_fallthru
          _
      $region36: #{tpu_custom_call.1} parent=5 // pred_fallthru
        _
      %p1198 = scmp.le.s32.totalorder 2, %s22
      // Predicated region
      $region57: #{tpu_custom_call.1} parent=5 // pred_check
        %p1199 = pneg %p1198
      $region58: #{tpu_custom_call.1} parent=5 // pred_check_branch
        %1201 = sbr.rel (%p1199) target = $region60
      $region59: #{tpu_custom_call.1} parent=5 // pred_region
        %s1202 = ssub.s32 %s22, 2
        // Predicated region
        $region61: #{tpu_custom_call.1} parent=59 // pred_check
          %p1203 = pneg %p140
        $region62: #{tpu_custom_call.1} parent=59 // pred_check_branch
          %1205 = sbr.rel (%p1203) target = $region64
        $region63: #{tpu_custom_call.1} parent=59 // pred_region
          %s1206 = sand.u32 %s125, 1
          %s1207 = scalar_lea.sflag [#allocation4], %s1206
          %s1208 = sand.u32 %s125, 1
          %s1209 = smul.addr %s1208, 16
          %s1210 = scalar_lea.vmem [#allocation8], %s1209
          %1212 = dma.done %s1207, 256
        $region64: #{tpu_custom_call.1} parent=59 // pred_fallthru
          _
        // Predicated region
        $region65: #{tpu_custom_call.1} parent=59 // pred_check
          %p1213 = pneg %p166
        $region66: #{tpu_custom_call.1} parent=59 // pred_check_branch
          %1215 = sbr.rel (%p1213) target = $region68
        $region67: #{tpu_custom_call.1} parent=59 // pred_region
          %s1216 = sand.u32 %s151, 1
          %s1217 = scalar_lea.sflag [#allocation10], %s1216
          %s1218 = sand.u32 %s151, 1
          %s1219 = smul.addr %s1218, 64
          %s1220 = scalar_lea.vmem [#allocation9], %s1219
          %1222 = dma.done %s1217, 1024
        $region68: #{tpu_custom_call.1} parent=59 // pred_fallthru
          _
      $region60: #{tpu_custom_call.1} parent=5 // pred_fallthru
        _
    $region6: #{tpu_custom_call.1} parent=1 // loop_footer
      %s26 = sadd.s32 1, %s22
    $region7: #{tpu_custom_call.1} parent=1 // loop_footer_branch
      %21 = sbr.rel target = $region3
    $region8: #{tpu_custom_call.1} parent=1 // loop_exit
      _
    %1223 = vsyncpa [#allocation3], 1
    %s1224 = scalar_lea.sflag [#allocation3], 1
    %1225 = vsyncpa %s1224, 1
    %1226 = vsyncpa [#allocation6], 1
    %1227 = vsyncpa [#allocation4], 1
    %s1228 = scalar_lea.sflag [#allocation4], 1
    %1229 = vsyncpa %s1228, 1
    %1230 = vsyncpa [#allocation10], 1
    %s1231 = scalar_lea.sflag [#allocation10], 1
    %1232 = vsyncpa %s1231, 1

</llo_original>
